<compile_context>
chip_gen: v7x
topology: tpu7x:2x2x1
jax: 0.10.0
libtpu: 0.0.40
codegen_flags: <defaults>
</compile_context>

<pallas_src>
import functools

import numpy as np
import jax
import jax.numpy as jnp
from jax.experimental import pallas as pl
from jax.experimental.pallas import tpu as pltpu


def _round_up(x, m):
    return ((x + m - 1) // m) * m


def _spectral_conv1d_kernel(x_ref, cosf_ref, msinf_ref, wr_ref, wi_ref,
                            invr_ref, invi_ref, o_ref):
    # x_ref    : (T*E_p, N_p)   T batched (b,h) slices, padded channels as rows
    # cosf_ref : (N_p, M)       forward rDFT, real part  ( cos)
    # msinf_ref: (N_p, M)       forward rDFT, imag part  (-sin)
    # wr_ref   : (E_p, O_p, M)  real spectral weights (zero-padded channels)
    # wi_ref   : (E_p, O_p, M)  imag spectral weights
    # invr_ref : (M, N_p)       inverse rDFT (real path), incl. 1/N & symmetry
    # invi_ref : (M, N_p)       inverse rDFT (imag path)
    # o_ref    : (T*O_p, N_p)
    e_p, o_p, m = wr_ref.shape
    t = x_ref.shape[0] // e_p

    x = x_ref[...]
    # Forward truncated rFFT: two MXU matmuls (no lane-axis slice/concat).
    xr = jnp.dot(x, cosf_ref[...], preferred_element_type=jnp.float32)    # (T*E_p, M)
    xi = jnp.dot(x, msinf_ref[...], preferred_element_type=jnp.float32)   # (T*E_p, M)
    # E_p is a multiple of 8 -> these sublane split reshapes are layout no-ops.
    xr = xr.reshape(t, e_p, m)
    xi = xi.reshape(t, e_p, m)

    wr = wr_ref[...]
    wi = wi_ref[...]

    # Complex channel mix contracted over in-channels with an unrolled loop so
    # only (T, O_p, M)-sized temporaries ever exist (never (T, E, O, M)).
    # TODO(synk): for large E_p/O_p move this E-contraction onto the MXU via a
    # frequency-batched lax.dot_general (batch dim M, weights permuted to (M,E,O)).
    o_r = jnp.zeros((t, o_p, m), jnp.float32)
    o_i = jnp.zeros((t, o_p, m), jnp.float32)
    for e in range(e_p):
        xre = xr[:, e, :][:, None, :]          # (T, 1, M)
        xie = xi[:, e, :][:, None, :]          # (T, 1, M)
        wre = wr[e][None]                      # (1, O_p, M)
        wie = wi[e][None]                      # (1, O_p, M)
        o_r = o_r + xre * wre - xie * wie
        o_i = o_i + xre * wie + xie * wre

    # Inverse rFFT back to length N_p: two MXU matmuls summed.  O_p is a multiple
    # of 8 so the merge-leading-dims reshape is free.
    y = (jnp.dot(o_r.reshape(t * o_p, m), invr_ref[...],
                 preferred_element_type=jnp.float32)
         + jnp.dot(o_i.reshape(t * o_p, m), invi_ref[...],
                   preferred_element_type=jnp.float32))                   # (T*O_p, N_p)
    o_ref[...] = y.astype(o_ref.dtype)


@functools.lru_cache(maxsize=None)
def _dft_matrices(seq_len, n_pad, modes):
    """Host-side forward/inverse truncated real-DFT matrices, zero-padded to n_pad."""
    n = np.arange(seq_len)[:, None].astype(np.float64)
    k = np.arange(modes)[None, :].astype(np.float64)
    ang = 2.0 * np.pi * n * k / seq_len                       # (N, M)

    cosf = np.zeros((n_pad, modes), np.float32)
    msinf = np.zeros((n_pad, modes), np.float32)
    cosf[:seq_len] = np.cos(ang)
    msinf[:seq_len] = -np.sin(ang)

    # irFFT of a spectrum whose only nonzero bins are 0..modes-1:
    #   y[n] = (1/N) * sum_k c_k * (Or[k] cos(ang) - Oi[k] sin(ang))
    # with c_0 = 1, c_k = 2 for 0 < k < N/2, c_{N/2} = 1 (Nyquist, if present).
    kk = np.arange(modes)
    c = np.where(kk == 0, 1.0, 2.0)
    if seq_len % 2 == 0:
        c = np.where(kk == seq_len // 2, 1.0, c)
    c = (c / seq_len)[:, None]                                # (M, 1)
    invr = np.zeros((modes, n_pad), np.float32)
    invi = np.zeros((modes, n_pad), np.float32)
    invr[:, :seq_len] = c * np.cos(ang.T)
    invi[:, :seq_len] = -c * np.sin(ang.T)
    return cosf, msinf, invr, invi


def _tile_config(bh, e_p, o_p, n_p, itemsize=4):
    """Generation-aware choice of tile size T, grid size, padded BH and VMEM budget."""
    # Defaults: single TensorCore (v5e/v6e), 128 MiB physical VMEM.
    min_grid, target_rows, vmem_budget = 1, 512, 48 << 20
    try:
        dev = jax.devices()[0]
        kind = getattr(dev, "device_kind", "").lower()
        multi_core = (getattr(dev, "num_cores", None) or 1) > 1
        if "v7" in kind or "7x" in kind or "v4" in kind or "v5p" in kind or multi_core:
            # Two TensorCores: keep both fed with a balanced "parallel" grid;
            # v7x has only 64 MiB VMEM, so budget tighter.
            min_grid, target_rows, vmem_budget = 2, 256, 40 << 20
    except Exception:
        pass
    rows_per_slice = max(e_p, o_p)
    cap_rows = max(1, target_rows // rows_per_slice)
    # Keep the double-buffered x/out tiles under ~half the budget so the DFT
    # matrices, weights and f32 temporaries fit alongside.
    cap_vmem = max(1, (vmem_budget // 2) // (2 * itemsize * n_p * (e_p + o_p)))
    t = max(1, min(pl.cdiv(bh, min_grid), cap_rows, cap_vmem))
    grid = pl.cdiv(bh, t)
    return t, grid, grid * t, vmem_budget


def spectral_conv1d(x, weights_real, weights_imag):
    """Pallas TPU forward of SpectralConv1d: rFFT -> complex channel mix -> irFFT."""
    B, H, E, N = x.shape
    E2, O, M = weights_real.shape
    assert E2 == E and weights_imag.shape == (E, O, M)
    assert M <= N // 2 + 1, "modes must not exceed N//2 + 1 (rFFT bin count)"

    BH = B * H
    E_p = _round_up(E, 8)                       # layout-free reshapes in-kernel
    O_p = _round_up(O, 8)
    N_p = _round_up(max(N, 128), 128)           # lane-dense loads / stores

    T, grid_n, BH_p, vmem_budget = _tile_config(BH, E_p, O_p, N_p)

    cosf, msinf, invr, invi = _dft_matrices(N, N_p, M)
    cosf, msinf, invr, invi = map(jnp.asarray, (cosf, msinf, invr, invi))

    # Pad (BH, E, N) -> (BH_p, E_p, N_p) with zeros (padded channels have zero
    # weights; padded (b,h) slices and padded lanes are sliced away afterwards).
    x3 = jnp.pad(x.reshape(BH, E, N).astype(jnp.float32),
                 ((0, BH_p - BH), (0, E_p - E), (0, N_p - N)))
    x_flat = x3.reshape(BH_p * E_p, N_p)
    wr = jnp.pad(weights_real.astype(jnp.float32),
                 ((0, E_p - E), (0, O_p - O), (0, 0)))
    wi = jnp.pad(weights_imag.astype(jnp.float32),
                 ((0, E_p - E), (0, O_p - O), (0, 0)))

    flops = grid_n * (4 * T * E_p * N_p * M          # forward DFT matmuls
                      + 8 * T * E_p * O_p * M        # channel mix
                      + 4 * T * O_p * M * N_p)       # inverse DFT matmuls
    bytes_accessed = 4 * (BH_p * E_p * N_p + BH_p * O_p * N_p
                          + 2 * N_p * M + 2 * M * N_p + 2 * E_p * O_p * M)
    cost = pl.CostEstimate(flops=flops, transcendentals=0,
                           bytes_accessed=bytes_accessed)

    out = pl.pallas_call(
        _spectral_conv1d_kernel,
        out_shape=jax.ShapeDtypeStruct((BH_p * O_p, N_p), jnp.float32),
        grid=(grid_n,),
        in_specs=[
            pl.BlockSpec((T * E_p, N_p), lambda i: (i, 0)),
            # Constant-index operands: DMA'd once, buffer reused across grid steps.
            # TODO(synk): on v7x with very large N*M, mark these pl.Buffered(1) and
            # tile the DFT matrices over N instead of holding them fully resident.
            pl.BlockSpec((N_p, M), lambda i: (0, 0)),
            pl.BlockSpec((N_p, M), lambda i: (0, 0)),
            pl.BlockSpec((E_p, O_p, M), lambda i: (0, 0, 0)),
            pl.BlockSpec((E_p, O_p, M), lambda i: (0, 0, 0)),
            pl.BlockSpec((M, N_p), lambda i: (0, 0)),
            pl.BlockSpec((M, N_p), lambda i: (0, 0)),
        ],
        out_specs=pl.BlockSpec((T * O_p, N_p), lambda i: (i, 0)),
        compiler_params=pltpu.CompilerParams(
            dimension_semantics=("parallel",),
            vmem_limit_bytes=int(vmem_budget)),
        cost_estimate=cost,
    )(x_flat, cosf, msinf, wr, wi, invr, invi)

    y = out.reshape(BH_p, O_p, N_p)[:BH, :O, :N]
    return y.reshape(B, H, O, N).astype(x.dtype)


def spectral_conv1d_ref(x, wr, wi):
    """Pure-JAX reference mirroring the PyTorch forward (uses real FFT ops)."""
    B, H, E, N = x.shape
    _, O, M = wr.shape
    x_ft = jnp.fft.rfft(x)
    a = x_ft[..., :M]
    o_r = (jnp.einsum('bjix,iox->bjox', a.real, wr)
           - jnp.einsum('bjix,iox->bjox', a.imag, wi))
    o_i = (jnp.einsum('bjix,iox->bjox', a.real, wi)
           + jnp.einsum('bjix,iox->bjox', a.imag, wr))
    out_ft = jnp.zeros((B, H, O, N // 2 + 1), dtype=jnp.complex64)
    out_ft = out_ft.at[..., :M].set(o_r + 1j * o_i)
    return jnp.fft.irfft(out_ft, n=N)


if __name__ == "__main__":
    B, H = 2, 4
    in_channels, out_channels, seq_len = 4, 4, 16
    modes = min(32, seq_len // 2)                     # == 8
    scale = 1.0 / (in_channels * out_channels)

    key = jax.random.PRNGKey(0)
    kx, kwr, kwi = jax.random.split(key, 3)
    x = jax.random.normal(kx, (B, H, in_channels, seq_len), dtype=jnp.float32)
    weights_real = scale * jax.random.uniform(
        kwr, (in_channels, out_channels, modes), dtype=jnp.float32)
    weights_imag = scale * jax.random.uniform(
        kwi, (in_channels, out_channels, modes), dtype=jnp.float32)

    y = spectral_conv1d(x, weights_real, weights_imag)
    y = jax.block_until_ready(y)

    y_ref = spectral_conv1d_ref(x, weights_real, weights_imag)
    np.testing.assert_allclose(np.asarray(y), np.asarray(y_ref),
                               rtol=1e-3, atol=1e-4)
    print("KERNEL_OK")
</pallas_src>

<mosaic_0001>
module attributes {stable_mosaic.version = 11 : i64} {
  func.func @_spectral_conv1d_kernel(%arg0: i32, %arg1: memref<64x128xf32, #tpu.memory_space<vmem>>, %arg2: memref<128x8xf32, #tpu.memory_space<vmem>>, %arg3: memref<128x8xf32, #tpu.memory_space<vmem>>, %arg4: memref<8x8x8xf32, #tpu.memory_space<vmem>>, %arg5: memref<8x8x8xf32, #tpu.memory_space<vmem>>, %arg6: memref<8x128xf32, #tpu.memory_space<vmem>>, %arg7: memref<8x128xf32, #tpu.memory_space<vmem>>, %arg8: memref<64x128xf32, #tpu.memory_space<vmem>>) attributes {dimension_semantics = [#tpu.dimension_semantics<parallel>], iteration_bounds = array<i64: 1>, scalar_prefetch = 0 : i64, scratch_operands = 0 : i64, tpu.core_type = #tpu.core_type<tc>, window_params = [{transform_indices = @transform_0, window_bounds = array<i64: 64, 128>}, {pipeline_mode = #tpu.pipeline_mode<synchronous>, transform_indices = @transform_1, window_bounds = array<i64: 128, 8>}, {pipeline_mode = #tpu.pipeline_mode<synchronous>, transform_indices = @transform_2, window_bounds = array<i64: 128, 8>}, {pipeline_mode = #tpu.pipeline_mode<synchronous>, transform_indices = @transform_3, window_bounds = array<i64: 8, 8, 8>}, {pipeline_mode = #tpu.pipeline_mode<synchronous>, transform_indices = @transform_4, window_bounds = array<i64: 8, 8, 8>}, {pipeline_mode = #tpu.pipeline_mode<synchronous>, transform_indices = @transform_5, window_bounds = array<i64: 8, 128>}, {pipeline_mode = #tpu.pipeline_mode<synchronous>, transform_indices = @transform_6, window_bounds = array<i64: 8, 128>}, {transform_indices = @transform_7, window_bounds = array<i64: 64, 128>}]} {
    %c0 = arith.constant 0 : index
    %c0_0 = arith.constant 0 : index
    %0 = vector.load %arg1[%c0, %c0_0] : memref<64x128xf32, #tpu.memory_space<vmem>>, vector<64x128xf32>
    %c0_1 = arith.constant 0 : index
    %c0_2 = arith.constant 0 : index
    %1 = vector.load %arg2[%c0_1, %c0_2] : memref<128x8xf32, #tpu.memory_space<vmem>>, vector<128x8xf32>
    %cst = arith.constant dense<0.000000e+00> : vector<64x8xf32>
    %2 = tpu.matmul %0, %1, %cst {dimension_numbers = #tpu.dot_dimension_numbers<[1], [0], [0], [1], [0, 0, 1, 1], [], []>} : vector<64x128xf32>, vector<128x8xf32>, vector<64x8xf32> -> vector<64x8xf32>
    %c0_3 = arith.constant 0 : index
    %c0_4 = arith.constant 0 : index
    %3 = vector.load %arg3[%c0_3, %c0_4] : memref<128x8xf32, #tpu.memory_space<vmem>>, vector<128x8xf32>
    %cst_5 = arith.constant dense<0.000000e+00> : vector<64x8xf32>
    %4 = tpu.matmul %0, %3, %cst_5 {dimension_numbers = #tpu.dot_dimension_numbers<[1], [0], [0], [1], [0, 0, 1, 1], [], []>} : vector<64x128xf32>, vector<128x8xf32>, vector<64x8xf32> -> vector<64x8xf32>
    %5 = vector.shape_cast %2 : vector<64x8xf32> to vector<8x8x8xf32>
    %6 = vector.shape_cast %4 : vector<64x8xf32> to vector<8x8x8xf32>
    %c0_6 = arith.constant 0 : index
    %c0_7 = arith.constant 0 : index
    %c0_8 = arith.constant 0 : index
    %7 = vector.load %arg4[%c0_6, %c0_7, %c0_8] : memref<8x8x8xf32, #tpu.memory_space<vmem>>, vector<8x8x8xf32>
    %c0_9 = arith.constant 0 : index
    %c0_10 = arith.constant 0 : index
    %c0_11 = arith.constant 0 : index
    %8 = vector.load %arg5[%c0_9, %c0_10, %c0_11] : memref<8x8x8xf32, #tpu.memory_space<vmem>>, vector<8x8x8xf32>
    %cst_12 = arith.constant 0.000000e+00 : f32
    %9 = vector.broadcast %cst_12 : f32 to vector<8x8x8xf32>
    %cst_13 = arith.constant 0.000000e+00 : f32
    %10 = vector.broadcast %cst_13 : f32 to vector<8x8x8xf32>
    %11 = vector.extract_strided_slice %5 {offsets = [0, 0, 0], sizes = [8, 1, 8], strides = [1, 1, 1]} : vector<8x8x8xf32> to vector<8x1x8xf32>
    %12 = vector.shape_cast %11 : vector<8x1x8xf32> to vector<8x8xf32>
    %13 = vector.shape_cast %12 : vector<8x8xf32> to vector<8x1x8xf32>
    %14 = vector.extract_strided_slice %6 {offsets = [0, 0, 0], sizes = [8, 1, 8], strides = [1, 1, 1]} : vector<8x8x8xf32> to vector<8x1x8xf32>
    %15 = vector.shape_cast %14 : vector<8x1x8xf32> to vector<8x8xf32>
    %16 = vector.shape_cast %15 : vector<8x8xf32> to vector<8x1x8xf32>
    %17 = vector.extract_strided_slice %7 {offsets = [0, 0, 0], sizes = [1, 8, 8], strides = [1, 1, 1]} : vector<8x8x8xf32> to vector<1x8x8xf32>
    %18 = vector.shape_cast %17 : vector<1x8x8xf32> to vector<8x8xf32>
    %19 = vector.shape_cast %18 : vector<8x8xf32> to vector<1x8x8xf32>
    %20 = vector.extract_strided_slice %8 {offsets = [0, 0, 0], sizes = [1, 8, 8], strides = [1, 1, 1]} : vector<8x8x8xf32> to vector<1x8x8xf32>
    %21 = vector.shape_cast %20 : vector<1x8x8xf32> to vector<8x8xf32>
    %22 = vector.shape_cast %21 : vector<8x8xf32> to vector<1x8x8xf32>
    %23 = vector.broadcast %13 : vector<8x1x8xf32> to vector<8x8x8xf32>
    %24 = vector.broadcast %19 : vector<1x8x8xf32> to vector<8x8x8xf32>
    %25 = arith.mulf %23, %24 : vector<8x8x8xf32>
    %26 = arith.addf %9, %25 : vector<8x8x8xf32>
    %27 = vector.broadcast %16 : vector<8x1x8xf32> to vector<8x8x8xf32>
    %28 = vector.broadcast %22 : vector<1x8x8xf32> to vector<8x8x8xf32>
    %29 = arith.mulf %27, %28 : vector<8x8x8xf32>
    %30 = arith.subf %26, %29 : vector<8x8x8xf32>
    %31 = vector.broadcast %13 : vector<8x1x8xf32> to vector<8x8x8xf32>
    %32 = vector.broadcast %22 : vector<1x8x8xf32> to vector<8x8x8xf32>
    %33 = arith.mulf %31, %32 : vector<8x8x8xf32>
    %34 = arith.addf %10, %33 : vector<8x8x8xf32>
    %35 = vector.broadcast %16 : vector<8x1x8xf32> to vector<8x8x8xf32>
    %36 = vector.broadcast %19 : vector<1x8x8xf32> to vector<8x8x8xf32>
    %37 = arith.mulf %35, %36 : vector<8x8x8xf32>
    %38 = arith.addf %34, %37 : vector<8x8x8xf32>
    %39 = vector.extract_strided_slice %5 {offsets = [0, 1, 0], sizes = [8, 1, 8], strides = [1, 1, 1]} : vector<8x8x8xf32> to vector<8x1x8xf32>
    %40 = vector.shape_cast %39 : vector<8x1x8xf32> to vector<8x8xf32>
    %41 = vector.shape_cast %40 : vector<8x8xf32> to vector<8x1x8xf32>
    %42 = vector.extract_strided_slice %6 {offsets = [0, 1, 0], sizes = [8, 1, 8], strides = [1, 1, 1]} : vector<8x8x8xf32> to vector<8x1x8xf32>
    %43 = vector.shape_cast %42 : vector<8x1x8xf32> to vector<8x8xf32>
    %44 = vector.shape_cast %43 : vector<8x8xf32> to vector<8x1x8xf32>
    %45 = vector.extract_strided_slice %7 {offsets = [1, 0, 0], sizes = [1, 8, 8], strides = [1, 1, 1]} : vector<8x8x8xf32> to vector<1x8x8xf32>
    %46 = vector.shape_cast %45 : vector<1x8x8xf32> to vector<8x8xf32>
    %47 = vector.shape_cast %46 : vector<8x8xf32> to vector<1x8x8xf32>
    %48 = vector.extract_strided_slice %8 {offsets = [1, 0, 0], sizes = [1, 8, 8], strides = [1, 1, 1]} : vector<8x8x8xf32> to vector<1x8x8xf32>
    %49 = vector.shape_cast %48 : vector<1x8x8xf32> to vector<8x8xf32>
    %50 = vector.shape_cast %49 : vector<8x8xf32> to vector<1x8x8xf32>
    %51 = vector.broadcast %41 : vector<8x1x8xf32> to vector<8x8x8xf32>
    %52 = vector.broadcast %47 : vector<1x8x8xf32> to vector<8x8x8xf32>
    %53 = arith.mulf %51, %52 : vector<8x8x8xf32>
    %54 = arith.addf %30, %53 : vector<8x8x8xf32>
    %55 = vector.broadcast %44 : vector<8x1x8xf32> to vector<8x8x8xf32>
    %56 = vector.broadcast %50 : vector<1x8x8xf32> to vector<8x8x8xf32>
    %57 = arith.mulf %55, %56 : vector<8x8x8xf32>
    %58 = arith.subf %54, %57 : vector<8x8x8xf32>
    %59 = vector.broadcast %41 : vector<8x1x8xf32> to vector<8x8x8xf32>
    %60 = vector.broadcast %50 : vector<1x8x8xf32> to vector<8x8x8xf32>
    %61 = arith.mulf %59, %60 : vector<8x8x8xf32>
    %62 = arith.addf %38, %61 : vector<8x8x8xf32>
    %63 = vector.broadcast %44 : vector<8x1x8xf32> to vector<8x8x8xf32>
    %64 = vector.broadcast %47 : vector<1x8x8xf32> to vector<8x8x8xf32>
    %65 = arith.mulf %63, %64 : vector<8x8x8xf32>
    %66 = arith.addf %62, %65 : vector<8x8x8xf32>
    %67 = vector.extract_strided_slice %5 {offsets = [0, 2, 0], sizes = [8, 1, 8], strides = [1, 1, 1]} : vector<8x8x8xf32> to vector<8x1x8xf32>
    %68 = vector.shape_cast %67 : vector<8x1x8xf32> to vector<8x8xf32>
    %69 = vector.shape_cast %68 : vector<8x8xf32> to vector<8x1x8xf32>
    %70 = vector.extract_strided_slice %6 {offsets = [0, 2, 0], sizes = [8, 1, 8], strides = [1, 1, 1]} : vector<8x8x8xf32> to vector<8x1x8xf32>
    %71 = vector.shape_cast %70 : vector<8x1x8xf32> to vector<8x8xf32>
    %72 = vector.shape_cast %71 : vector<8x8xf32> to vector<8x1x8xf32>
    %73 = vector.extract_strided_slice %7 {offsets = [2, 0, 0], sizes = [1, 8, 8], strides = [1, 1, 1]} : vector<8x8x8xf32> to vector<1x8x8xf32>
    %74 = vector.shape_cast %73 : vector<1x8x8xf32> to vector<8x8xf32>
    %75 = vector.shape_cast %74 : vector<8x8xf32> to vector<1x8x8xf32>
    %76 = vector.extract_strided_slice %8 {offsets = [2, 0, 0], sizes = [1, 8, 8], strides = [1, 1, 1]} : vector<8x8x8xf32> to vector<1x8x8xf32>
    %77 = vector.shape_cast %76 : vector<1x8x8xf32> to vector<8x8xf32>
    %78 = vector.shape_cast %77 : vector<8x8xf32> to vector<1x8x8xf32>
    %79 = vector.broadcast %69 : vector<8x1x8xf32> to vector<8x8x8xf32>
    %80 = vector.broadcast %75 : vector<1x8x8xf32> to vector<8x8x8xf32>
    %81 = arith.mulf %79, %80 : vector<8x8x8xf32>
    %82 = arith.addf %58, %81 : vector<8x8x8xf32>
    %83 = vector.broadcast %72 : vector<8x1x8xf32> to vector<8x8x8xf32>
    %84 = vector.broadcast %78 : vector<1x8x8xf32> to vector<8x8x8xf32>
    %85 = arith.mulf %83, %84 : vector<8x8x8xf32>
    %86 = arith.subf %82, %85 : vector<8x8x8xf32>
    %87 = vector.broadcast %69 : vector<8x1x8xf32> to vector<8x8x8xf32>
    %88 = vector.broadcast %78 : vector<1x8x8xf32> to vector<8x8x8xf32>
    %89 = arith.mulf %87, %88 : vector<8x8x8xf32>
    %90 = arith.addf %66, %89 : vector<8x8x8xf32>
    %91 = vector.broadcast %72 : vector<8x1x8xf32> to vector<8x8x8xf32>
    %92 = vector.broadcast %75 : vector<1x8x8xf32> to vector<8x8x8xf32>
    %93 = arith.mulf %91, %92 : vector<8x8x8xf32>
    %94 = arith.addf %90, %93 : vector<8x8x8xf32>
    %95 = vector.extract_strided_slice %5 {offsets = [0, 3, 0], sizes = [8, 1, 8], strides = [1, 1, 1]} : vector<8x8x8xf32> to vector<8x1x8xf32>
    %96 = vector.shape_cast %95 : vector<8x1x8xf32> to vector<8x8xf32>
    %97 = vector.shape_cast %96 : vector<8x8xf32> to vector<8x1x8xf32>
    %98 = vector.extract_strided_slice %6 {offsets = [0, 3, 0], sizes = [8, 1, 8], strides = [1, 1, 1]} : vector<8x8x8xf32> to vector<8x1x8xf32>
    %99 = vector.shape_cast %98 : vector<8x1x8xf32> to vector<8x8xf32>
    %100 = vector.shape_cast %99 : vector<8x8xf32> to vector<8x1x8xf32>
    %101 = vector.extract_strided_slice %7 {offsets = [3, 0, 0], sizes = [1, 8, 8], strides = [1, 1, 1]} : vector<8x8x8xf32> to vector<1x8x8xf32>
    %102 = vector.shape_cast %101 : vector<1x8x8xf32> to vector<8x8xf32>
    %103 = vector.shape_cast %102 : vector<8x8xf32> to vector<1x8x8xf32>
    %104 = vector.extract_strided_slice %8 {offsets = [3, 0, 0], sizes = [1, 8, 8], strides = [1, 1, 1]} : vector<8x8x8xf32> to vector<1x8x8xf32>
    %105 = vector.shape_cast %104 : vector<1x8x8xf32> to vector<8x8xf32>
    %106 = vector.shape_cast %105 : vector<8x8xf32> to vector<1x8x8xf32>
    %107 = vector.broadcast %97 : vector<8x1x8xf32> to vector<8x8x8xf32>
    %108 = vector.broadcast %103 : vector<1x8x8xf32> to vector<8x8x8xf32>
    %109 = arith.mulf %107, %108 : vector<8x8x8xf32>
    %110 = arith.addf %86, %109 : vector<8x8x8xf32>
    %111 = vector.broadcast %100 : vector<8x1x8xf32> to vector<8x8x8xf32>
    %112 = vector.broadcast %106 : vector<1x8x8xf32> to vector<8x8x8xf32>
    %113 = arith.mulf %111, %112 : vector<8x8x8xf32>
    %114 = arith.subf %110, %113 : vector<8x8x8xf32>
    %115 = vector.broadcast %97 : vector<8x1x8xf32> to vector<8x8x8xf32>
    %116 = vector.broadcast %106 : vector<1x8x8xf32> to vector<8x8x8xf32>
    %117 = arith.mulf %115, %116 : vector<8x8x8xf32>
    %118 = arith.addf %94, %117 : vector<8x8x8xf32>
    %119 = vector.broadcast %100 : vector<8x1x8xf32> to vector<8x8x8xf32>
    %120 = vector.broadcast %103 : vector<1x8x8xf32> to vector<8x8x8xf32>
    %121 = arith.mulf %119, %120 : vector<8x8x8xf32>
    %122 = arith.addf %118, %121 : vector<8x8x8xf32>
    %123 = vector.extract_strided_slice %5 {offsets = [0, 4, 0], sizes = [8, 1, 8], strides = [1, 1, 1]} : vector<8x8x8xf32> to vector<8x1x8xf32>
    %124 = vector.shape_cast %123 : vector<8x1x8xf32> to vector<8x8xf32>
    %125 = vector.shape_cast %124 : vector<8x8xf32> to vector<8x1x8xf32>
    %126 = vector.extract_strided_slice %6 {offsets = [0, 4, 0], sizes = [8, 1, 8], strides = [1, 1, 1]} : vector<8x8x8xf32> to vector<8x1x8xf32>
    %127 = vector.shape_cast %126 : vector<8x1x8xf32> to vector<8x8xf32>
    %128 = vector.shape_cast %127 : vector<8x8xf32> to vector<8x1x8xf32>
    %129 = vector.extract_strided_slice %7 {offsets = [4, 0, 0], sizes = [1, 8, 8], strides = [1, 1, 1]} : vector<8x8x8xf32> to vector<1x8x8xf32>
    %130 = vector.shape_cast %129 : vector<1x8x8xf32> to vector<8x8xf32>
    %131 = vector.shape_cast %130 : vector<8x8xf32> to vector<1x8x8xf32>
    %132 = vector.extract_strided_slice %8 {offsets = [4, 0, 0], sizes = [1, 8, 8], strides = [1, 1, 1]} : vector<8x8x8xf32> to vector<1x8x8xf32>
    %133 = vector.shape_cast %132 : vector<1x8x8xf32> to vector<8x8xf32>
    %134 = vector.shape_cast %133 : vector<8x8xf32> to vector<1x8x8xf32>
    %135 = vector.broadcast %125 : vector<8x1x8xf32> to vector<8x8x8xf32>
    %136 = vector.broadcast %131 : vector<1x8x8xf32> to vector<8x8x8xf32>
    %137 = arith.mulf %135, %136 : vector<8x8x8xf32>
    %138 = arith.addf %114, %137 : vector<8x8x8xf32>
    %139 = vector.broadcast %128 : vector<8x1x8xf32> to vector<8x8x8xf32>
    %140 = vector.broadcast %134 : vector<1x8x8xf32> to vector<8x8x8xf32>
    %141 = arith.mulf %139, %140 : vector<8x8x8xf32>
    %142 = arith.subf %138, %141 : vector<8x8x8xf32>
    %143 = vector.broadcast %125 : vector<8x1x8xf32> to vector<8x8x8xf32>
    %144 = vector.broadcast %134 : vector<1x8x8xf32> to vector<8x8x8xf32>
    %145 = arith.mulf %143, %144 : vector<8x8x8xf32>
    %146 = arith.addf %122, %145 : vector<8x8x8xf32>
    %147 = vector.broadcast %128 : vector<8x1x8xf32> to vector<8x8x8xf32>
    %148 = vector.broadcast %131 : vector<1x8x8xf32> to vector<8x8x8xf32>
    %149 = arith.mulf %147, %148 : vector<8x8x8xf32>
    %150 = arith.addf %146, %149 : vector<8x8x8xf32>
    %151 = vector.extract_strided_slice %5 {offsets = [0, 5, 0], sizes = [8, 1, 8], strides = [1, 1, 1]} : vector<8x8x8xf32> to vector<8x1x8xf32>
    %152 = vector.shape_cast %151 : vector<8x1x8xf32> to vector<8x8xf32>
    %153 = vector.shape_cast %152 : vector<8x8xf32> to vector<8x1x8xf32>
    %154 = vector.extract_strided_slice %6 {offsets = [0, 5, 0], sizes = [8, 1, 8], strides = [1, 1, 1]} : vector<8x8x8xf32> to vector<8x1x8xf32>
    %155 = vector.shape_cast %154 : vector<8x1x8xf32> to vector<8x8xf32>
    %156 = vector.shape_cast %155 : vector<8x8xf32> to vector<8x1x8xf32>
    %157 = vector.extract_strided_slice %7 {offsets = [5, 0, 0], sizes = [1, 8, 8], strides = [1, 1, 1]} : vector<8x8x8xf32> to vector<1x8x8xf32>
    %158 = vector.shape_cast %157 : vector<1x8x8xf32> to vector<8x8xf32>
    %159 = vector.shape_cast %158 : vector<8x8xf32> to vector<1x8x8xf32>
    %160 = vector.extract_strided_slice %8 {offsets = [5, 0, 0], sizes = [1, 8, 8], strides = [1, 1, 1]} : vector<8x8x8xf32> to vector<1x8x8xf32>
    %161 = vector.shape_cast %160 : vector<1x8x8xf32> to vector<8x8xf32>
    %162 = vector.shape_cast %161 : vector<8x8xf32> to vector<1x8x8xf32>
    %163 = vector.broadcast %153 : vector<8x1x8xf32> to vector<8x8x8xf32>
    %164 = vector.broadcast %159 : vector<1x8x8xf32> to vector<8x8x8xf32>
    %165 = arith.mulf %163, %164 : vector<8x8x8xf32>
    %166 = arith.addf %142, %165 : vector<8x8x8xf32>
    %167 = vector.broadcast %156 : vector<8x1x8xf32> to vector<8x8x8xf32>
    %168 = vector.broadcast %162 : vector<1x8x8xf32> to vector<8x8x8xf32>
    %169 = arith.mulf %167, %168 : vector<8x8x8xf32>
    %170 = arith.subf %166, %169 : vector<8x8x8xf32>
    %171 = vector.broadcast %153 : vector<8x1x8xf32> to vector<8x8x8xf32>
    %172 = vector.broadcast %162 : vector<1x8x8xf32> to vector<8x8x8xf32>
    %173 = arith.mulf %171, %172 : vector<8x8x8xf32>
    %174 = arith.addf %150, %173 : vector<8x8x8xf32>
    %175 = vector.broadcast %156 : vector<8x1x8xf32> to vector<8x8x8xf32>
    %176 = vector.broadcast %159 : vector<1x8x8xf32> to vector<8x8x8xf32>
    %177 = arith.mulf %175, %176 : vector<8x8x8xf32>
    %178 = arith.addf %174, %177 : vector<8x8x8xf32>
    %179 = vector.extract_strided_slice %5 {offsets = [0, 6, 0], sizes = [8, 1, 8], strides = [1, 1, 1]} : vector<8x8x8xf32> to vector<8x1x8xf32>
    %180 = vector.shape_cast %179 : vector<8x1x8xf32> to vector<8x8xf32>
    %181 = vector.shape_cast %180 : vector<8x8xf32> to vector<8x1x8xf32>
    %182 = vector.extract_strided_slice %6 {offsets = [0, 6, 0], sizes = [8, 1, 8], strides = [1, 1, 1]} : vector<8x8x8xf32> to vector<8x1x8xf32>
    %183 = vector.shape_cast %182 : vector<8x1x8xf32> to vector<8x8xf32>
    %184 = vector.shape_cast %183 : vector<8x8xf32> to vector<8x1x8xf32>
    %185 = vector.extract_strided_slice %7 {offsets = [6, 0, 0], sizes = [1, 8, 8], strides = [1, 1, 1]} : vector<8x8x8xf32> to vector<1x8x8xf32>
    %186 = vector.shape_cast %185 : vector<1x8x8xf32> to vector<8x8xf32>
    %187 = vector.shape_cast %186 : vector<8x8xf32> to vector<1x8x8xf32>
    %188 = vector.extract_strided_slice %8 {offsets = [6, 0, 0], sizes = [1, 8, 8], strides = [1, 1, 1]} : vector<8x8x8xf32> to vector<1x8x8xf32>
    %189 = vector.shape_cast %188 : vector<1x8x8xf32> to vector<8x8xf32>
    %190 = vector.shape_cast %189 : vector<8x8xf32> to vector<1x8x8xf32>
    %191 = vector.broadcast %181 : vector<8x1x8xf32> to vector<8x8x8xf32>
    %192 = vector.broadcast %187 : vector<1x8x8xf32> to vector<8x8x8xf32>
    %193 = arith.mulf %191, %192 : vector<8x8x8xf32>
    %194 = arith.addf %170, %193 : vector<8x8x8xf32>
    %195 = vector.broadcast %184 : vector<8x1x8xf32> to vector<8x8x8xf32>
    %196 = vector.broadcast %190 : vector<1x8x8xf32> to vector<8x8x8xf32>
    %197 = arith.mulf %195, %196 : vector<8x8x8xf32>
    %198 = arith.subf %194, %197 : vector<8x8x8xf32>
    %199 = vector.broadcast %181 : vector<8x1x8xf32> to vector<8x8x8xf32>
    %200 = vector.broadcast %190 : vector<1x8x8xf32> to vector<8x8x8xf32>
    %201 = arith.mulf %199, %200 : vector<8x8x8xf32>
    %202 = arith.addf %178, %201 : vector<8x8x8xf32>
    %203 = vector.broadcast %184 : vector<8x1x8xf32> to vector<8x8x8xf32>
    %204 = vector.broadcast %187 : vector<1x8x8xf32> to vector<8x8x8xf32>
    %205 = arith.mulf %203, %204 : vector<8x8x8xf32>
    %206 = arith.addf %202, %205 : vector<8x8x8xf32>
    %207 = vector.extract_strided_slice %5 {offsets = [0, 7, 0], sizes = [8, 1, 8], strides = [1, 1, 1]} : vector<8x8x8xf32> to vector<8x1x8xf32>
    %208 = vector.shape_cast %207 : vector<8x1x8xf32> to vector<8x8xf32>
    %209 = vector.shape_cast %208 : vector<8x8xf32> to vector<8x1x8xf32>
    %210 = vector.extract_strided_slice %6 {offsets = [0, 7, 0], sizes = [8, 1, 8], strides = [1, 1, 1]} : vector<8x8x8xf32> to vector<8x1x8xf32>
    %211 = vector.shape_cast %210 : vector<8x1x8xf32> to vector<8x8xf32>
    %212 = vector.shape_cast %211 : vector<8x8xf32> to vector<8x1x8xf32>
    %213 = vector.extract_strided_slice %7 {offsets = [7, 0, 0], sizes = [1, 8, 8], strides = [1, 1, 1]} : vector<8x8x8xf32> to vector<1x8x8xf32>
    %214 = vector.shape_cast %213 : vector<1x8x8xf32> to vector<8x8xf32>
    %215 = vector.shape_cast %214 : vector<8x8xf32> to vector<1x8x8xf32>
    %216 = vector.extract_strided_slice %8 {offsets = [7, 0, 0], sizes = [1, 8, 8], strides = [1, 1, 1]} : vector<8x8x8xf32> to vector<1x8x8xf32>
    %217 = vector.shape_cast %216 : vector<1x8x8xf32> to vector<8x8xf32>
    %218 = vector.shape_cast %217 : vector<8x8xf32> to vector<1x8x8xf32>
    %219 = vector.broadcast %209 : vector<8x1x8xf32> to vector<8x8x8xf32>
    %220 = vector.broadcast %215 : vector<1x8x8xf32> to vector<8x8x8xf32>
    %221 = arith.mulf %219, %220 : vector<8x8x8xf32>
    %222 = arith.addf %198, %221 : vector<8x8x8xf32>
    %223 = vector.broadcast %212 : vector<8x1x8xf32> to vector<8x8x8xf32>
    %224 = vector.broadcast %218 : vector<1x8x8xf32> to vector<8x8x8xf32>
    %225 = arith.mulf %223, %224 : vector<8x8x8xf32>
    %226 = arith.subf %222, %225 : vector<8x8x8xf32>
    %227 = vector.broadcast %209 : vector<8x1x8xf32> to vector<8x8x8xf32>
    %228 = vector.broadcast %218 : vector<1x8x8xf32> to vector<8x8x8xf32>
    %229 = arith.mulf %227, %228 : vector<8x8x8xf32>
    %230 = arith.addf %206, %229 : vector<8x8x8xf32>
    %231 = vector.broadcast %212 : vector<8x1x8xf32> to vector<8x8x8xf32>
    %232 = vector.broadcast %215 : vector<1x8x8xf32> to vector<8x8x8xf32>
    %233 = arith.mulf %231, %232 : vector<8x8x8xf32>
    %234 = arith.addf %230, %233 : vector<8x8x8xf32>
    %235 = vector.shape_cast %226 : vector<8x8x8xf32> to vector<64x8xf32>
    %c0_14 = arith.constant 0 : index
    %c0_15 = arith.constant 0 : index
    %236 = vector.load %arg6[%c0_14, %c0_15] : memref<8x128xf32, #tpu.memory_space<vmem>>, vector<8x128xf32>
    %cst_16 = arith.constant dense<0.000000e+00> : vector<64x128xf32>
    %237 = tpu.matmul %235, %236, %cst_16 {dimension_numbers = #tpu.dot_dimension_numbers<[1], [0], [0], [1], [0, 0, 1, 1], [], []>} : vector<64x8xf32>, vector<8x128xf32>, vector<64x128xf32> -> vector<64x128xf32>
    %238 = vector.shape_cast %234 : vector<8x8x8xf32> to vector<64x8xf32>
    %c0_17 = arith.constant 0 : index
    %c0_18 = arith.constant 0 : index
    %239 = vector.load %arg7[%c0_17, %c0_18] : memref<8x128xf32, #tpu.memory_space<vmem>>, vector<8x128xf32>
    %cst_19 = arith.constant dense<0.000000e+00> : vector<64x128xf32>
    %240 = tpu.matmul %238, %239, %cst_19 {dimension_numbers = #tpu.dot_dimension_numbers<[1], [0], [0], [1], [0, 0, 1, 1], [], []>} : vector<64x8xf32>, vector<8x128xf32>, vector<64x128xf32> -> vector<64x128xf32>
    %241 = arith.addf %237, %240 : vector<64x128xf32>
    %c0_20 = arith.constant 0 : index
    %c0_21 = arith.constant 0 : index
    %242 = vector.load %arg8[%c0_20, %c0_21] : memref<64x128xf32, #tpu.memory_space<vmem>>, vector<64x128xf32>
    tpu.vector_store %arg8[%c0_20, %c0_21], %241 {strides = array<i32>} : memref<64x128xf32, #tpu.memory_space<vmem>>, vector<64x128xf32>,
    return
  }
  func.func @transform_0(%arg0: i32) -> (i32, i32) {
    %c0_i32 = arith.constant 0 : i32
    %c0_i32_0 = arith.constant 0 : i32
    return %arg0, %c0_i32 : i32, i32
  }
  func.func @transform_1(%arg0: i32) -> (i32, i32) {
    %c0_i32 = arith.constant 0 : i32
    %c0_i32_0 = arith.constant 0 : i32
    %c0_i32_1 = arith.constant 0 : i32
    return %c0_i32, %c0_i32_0 : i32, i32
  }
  func.func @transform_2(%arg0: i32) -> (i32, i32) {
    %c0_i32 = arith.constant 0 : i32
    %c0_i32_0 = arith.constant 0 : i32
    %c0_i32_1 = arith.constant 0 : i32
    return %c0_i32, %c0_i32_0 : i32, i32
  }
  func.func @transform_3(%arg0: i32) -> (i32, i32, i32) {
    %c0_i32 = arith.constant 0 : i32
    %c0_i32_0 = arith.constant 0 : i32
    %c0_i32_1 = arith.constant 0 : i32
    %c0_i32_2 = arith.constant 0 : i32
    return %c0_i32, %c0_i32_0, %c0_i32_1 : i32, i32, i32
  }
  func.func @transform_4(%arg0: i32) -> (i32, i32, i32) {
    %c0_i32 = arith.constant 0 : i32
    %c0_i32_0 = arith.constant 0 : i32
    %c0_i32_1 = arith.constant 0 : i32
    %c0_i32_2 = arith.constant 0 : i32
    return %c0_i32, %c0_i32_0, %c0_i32_1 : i32, i32, i32
  }
  func.func @transform_5(%arg0: i32) -> (i32, i32) {
    %c0_i32 = arith.constant 0 : i32
    %c0_i32_0 = arith.constant 0 : i32
    %c0_i32_1 = arith.constant 0 : i32
    return %c0_i32, %c0_i32_0 : i32, i32
  }
  func.func @transform_6(%arg0: i32) -> (i32, i32) {
    %c0_i32 = arith.constant 0 : i32
    %c0_i32_0 = arith.constant 0 : i32
    %c0_i32_1 = arith.constant 0 : i32
    return %c0_i32, %c0_i32_0 : i32, i32
  }
  func.func @transform_7(%arg0: i32) -> (i32, i32) {
    %c0_i32 = arith.constant 0 : i32
    %c0_i32_0 = arith.constant 0 : i32
    return %arg0, %c0_i32 : i32, i32
  }
}

</mosaic_0001>

<llo_original>
// kernel: tpu_custom_call.1
$region0: #{tpu_custom_call.1}
  #allocation0 [shape = 'u32[]', space=smem, size = 0x4, offset = 0x4, fixed_abs, tag = 'smem constant byte address 0x4 - core index']
  #allocation1 [shape = 'u32[144,128]{1,0:T(1,128)}', space=vmem, size = 0x12000, scoped, tag = 'internal scratch']
  %s0 = inlined_call_operand.vmem [shape: f32[64,128], index: 0, kind: input, shape index: {}]
  %s1 = inlined_call_operand.vmem [shape: f32[128,8], index: 1, kind: input, shape index: {}]
  %s2 = inlined_call_operand.vmem [shape: f32[128,8], index: 2, kind: input, shape index: {}]
  %s3 = inlined_call_operand.vmem [shape: f32[8,8,8], index: 3, kind: input, shape index: {}]
  %s4 = inlined_call_operand.vmem [shape: f32[8,8,8], index: 4, kind: input, shape index: {}]
  %s5 = inlined_call_operand.vmem [shape: f32[8,128], index: 5, kind: input, shape index: {}]
  %s6 = inlined_call_operand.vmem [shape: f32[8,128], index: 6, kind: input, shape index: {}]
  %s7 = inlined_call_operand.hbm [shape: f32[64,128], index: 7, kind: output, shape index: {}]
  %s8 = sld [smem:[#allocation0]]
  $region38: #{tpu_custom_call.1} parent=0
    _
  %s10 = ssub.s32 1, %s8
  %s11 = scalar_select 0, %s10, %s8
  $region1: #{tpu_custom_call.1} parent=0
    #allocation2 [shape = 'u8[32768]{0}', space=vmem, size = 0x8000, scoped, tag = 'output window, operand 0, single buffered']
    #allocation3 [shape = 's32[1]{0}', space=sflag, size = 0x4, scoped, tag = 'scoped memory for tpu_custom_call.1']
    %12 = vsyncpa [#allocation3], 0
    // Predicated region
    $region2: #{tpu_custom_call.1} parent=1 // pred_check
      _
    $region3: #{tpu_custom_call.1} parent=1 // pred_check_branch
      %14 = sbr.rel (0) target = $region5
    $region4: #{tpu_custom_call.1} parent=1 // pred_region
      _
    $region5: #{tpu_custom_call.1} parent=1 // pred_fallthru
      _
    // Predicated region
    $region6: #{tpu_custom_call.1} parent=1 // pred_check
      _
    $region7: #{tpu_custom_call.1} parent=1 // pred_check_branch
      %16 = sbr.rel (0) target = $region9
    $region8: #{tpu_custom_call.1} parent=1 // pred_region
      _
    $region9: #{tpu_custom_call.1} parent=1 // pred_fallthru
      _
    // Predicated region
    $region10: #{tpu_custom_call.1} parent=1 // pred_check
      _
    $region11: #{tpu_custom_call.1} parent=1 // pred_check_branch
      %18 = sbr.rel (0) target = $region13
    $region12: #{tpu_custom_call.1} parent=1 // pred_region
      _
    $region13: #{tpu_custom_call.1} parent=1 // pred_fallthru
      _
    // Predicated region
    $region14: #{tpu_custom_call.1} parent=1 // pred_check
      _
    $region15: #{tpu_custom_call.1} parent=1 // pred_check_branch
      %20 = sbr.rel (0) target = $region17
    $region16: #{tpu_custom_call.1} parent=1 // pred_region
      _
    $region17: #{tpu_custom_call.1} parent=1 // pred_fallthru
      _
    // Predicated region
    $region18: #{tpu_custom_call.1} parent=1 // pred_check
      _
    $region19: #{tpu_custom_call.1} parent=1 // pred_check_branch
      %22 = sbr.rel (0) target = $region21
    $region20: #{tpu_custom_call.1} parent=1 // pred_region
      _
    $region21: #{tpu_custom_call.1} parent=1 // pred_fallthru
      _
    // Predicated region
    $region22: #{tpu_custom_call.1} parent=1 // pred_check
      _
    $region23: #{tpu_custom_call.1} parent=1 // pred_check_branch
      %24 = sbr.rel (0) target = $region25
    $region24: #{tpu_custom_call.1} parent=1 // pred_region
      _
    $region25: #{tpu_custom_call.1} parent=1 // pred_fallthru
      _
    // Predicated region
    $region26: #{tpu_custom_call.1} parent=1 // pred_check
      _
    $region27: #{tpu_custom_call.1} parent=1 // pred_check_branch
      %26 = sbr.rel (0) target = $region29
    $region28: #{tpu_custom_call.1} parent=1 // pred_region
      _
    $region29: #{tpu_custom_call.1} parent=1 // pred_fallthru
      _
    %v27 = vld [vmem:[%s0] sm:$0xff]
    %v28 = vld [vmem:[%s0 + $0x8] sm:$0xff]
    %v29 = vld [vmem:[%s0 + $0x10] sm:$0xff]
    %v30 = vld [vmem:[%s0 + $0x18] sm:$0xff]
    %v31 = vld [vmem:[%s0 + $0x20] sm:$0xff]
    %v32 = vld [vmem:[%s0 + $0x28] sm:$0xff]
    %v33 = vld [vmem:[%s0 + $0x30] sm:$0xff]
    %v34 = vld [vmem:[%s0 + $0x38] sm:$0xff]
    %v35 = vld [vmem:[%s1] sm:$0xff]
    %v36 = vld [vmem:[%s1 + $0x8] sm:$0xff]
    %v37 = vld [vmem:[%s1 + $0x10] sm:$0xff]
    %v38 = vld [vmem:[%s1 + $0x18] sm:$0xff]
    %v39 = vld [vmem:[%s1 + $0x20] sm:$0xff]
    %v40 = vld [vmem:[%s1 + $0x28] sm:$0xff]
    %v41 = vld [vmem:[%s1 + $0x30] sm:$0xff]
    %v42 = vld [vmem:[%s1 + $0x38] sm:$0xff]
    %v43 = vld [vmem:[%s1 + $0x40] sm:$0xff]
    %v44 = vld [vmem:[%s1 + $0x48] sm:$0xff]
    %v45 = vld [vmem:[%s1 + $0x50] sm:$0xff]
    %v46 = vld [vmem:[%s1 + $0x58] sm:$0xff]
    %v47 = vld [vmem:[%s1 + $0x60] sm:$0xff]
    %v48 = vld [vmem:[%s1 + $0x68] sm:$0xff]
    %v49 = vld [vmem:[%s1 + $0x70] sm:$0xff]
    %v50 = vld [vmem:[%s1 + $0x78] sm:$0xff]
    %51 = vmatprep.subr.mxu0 0.0
    %52 = vmatpush1.msra.mxu0 %v35
    %53 = vmatprep.subr.mxu0 0.0
    %54 = vmatpush1.msra.mxu0 %v36
    %55 = vmatprep.subr.mxu0 0.0
    %56 = vmatpush1.msra.mxu0 %v37
    %57 = vmatprep.subr.mxu0 0.0
    %58 = vmatpush1.msra.mxu0 %v38
    %59 = vmatprep.subr.mxu0 0.0
    %60 = vmatpush1.msra.mxu0 %v39
    %61 = vmatprep.subr.mxu0 0.0
    %62 = vmatpush1.msra.mxu0 %v40
    %63 = vmatprep.subr.mxu0 0.0
    %64 = vmatpush1.msra.mxu0 %v41
    %65 = vmatprep.subr.mxu0 0.0
    %66 = vmatpush1.msra.mxu0 %v42
    %67 = vmatprep.subr.mxu0 0.0
    %68 = vmatpush1.msra.mxu0 %v43
    %69 = vmatprep.subr.mxu0 0.0
    %70 = vmatpush1.msra.mxu0 %v44
    %71 = vmatprep.subr.mxu0 0.0
    %72 = vmatpush1.msra.mxu0 %v45
    %73 = vmatprep.subr.mxu0 0.0
    %74 = vmatpush1.msra.mxu0 %v46
    %75 = vmatprep.subr.mxu0 0.0
    %76 = vmatpush1.msra.mxu0 %v47
    %77 = vmatprep.subr.mxu0 0.0
    %78 = vmatpush1.msra.mxu0 %v48
    %79 = vmatprep.subr.mxu0 0.0
    %80 = vmatpush1.msra.mxu0 %v49
    %81 = vmatprep.subr.mxu0 0.0
    %82 = vmatpush1.msra.mxu0 %v50
    %83 = vmatprep.subr.mxu0 0.0
    %84 = vmatpush1.msra.mxu0 0.0
    %85 = vmatprep.subr.mxu0 0.0
    %86 = vmatpush1.msra.mxu0 0.0
    %87 = vmatprep.subr.mxu0 0.0
    %88 = vmatpush1.msra.mxu0 0.0
    %89 = vmatprep.subr.mxu0 0.0
    %90 = vmatpush1.msra.mxu0 0.0
    %91 = vmatprep.subr.mxu0 0.0
    %92 = vmatpush1.msra.mxu0 0.0
    %93 = vmatprep.subr.mxu0 0.0
    %94 = vmatpush1.msra.mxu0 0.0
    %95 = vmatprep.subr.mxu0 0.0
    %96 = vmatpush1.msra.mxu0 0.0
    %97 = vmatprep.subr.mxu0 0.0
    %98 = vmatpush1.msra.mxu0 0.0
    %99 = vmatprep.subr.mxu0 0.0
    %100 = vmatpush1.msra.mxu0 0.0
    %101 = vmatprep.subr.mxu0 0.0
    %102 = vmatpush1.msra.mxu0 0.0
    %103 = vmatprep.subr.mxu0 0.0
    %104 = vmatpush1.msra.mxu0 0.0
    %105 = vmatprep.subr.mxu0 0.0
    %106 = vmatpush1.msra.mxu0 0.0
    %107 = vmatprep.subr.mxu0 0.0
    %108 = vmatpush1.msra.mxu0 0.0
    %109 = vmatprep.subr.mxu0 0.0
    %110 = vmatpush1.msra.mxu0 0.0
    %111 = vmatprep.subr.mxu0 0.0
    %112 = vmatpush1.msra.mxu0 0.0
    %113 = vmatprep.subr.mxu0 0.0
    %114 = vmatpush1.msra.mxu0 0.0
    %115 = vmatprep.mubr.f32.mxu0 0.0
    %116 = vmatmul.mubr.f32.gmra.mrb[0].mxu0 %v27
    %v117 = vpop.f32.mrb[0].mxu0
    %v118 = vadd.f32 0.0, %v117
    %v119 = vpop.f32.mrb[0].mxu0
    %120 = vmatprep.mubr.f32.mxu0 0.0
    %121 = vmatmul.mubr.f32.gmra.mrb[0].mxu0 %v28
    %v122 = vpop.f32.mrb[0].mxu0
    %v123 = vadd.f32 0.0, %v122
    %v124 = vpop.f32.mrb[0].mxu0
    %125 = vmatprep.mubr.f32.mxu0 0.0
    %126 = vmatmul.mubr.f32.gmra.mrb[0].mxu0 %v29
    %v127 = vpop.f32.mrb[0].mxu0
    %v128 = vadd.f32 0.0, %v127
    %v129 = vpop.f32.mrb[0].mxu0
    %130 = vmatprep.mubr.f32.mxu0 0.0
    %131 = vmatmul.mubr.f32.gmra.mrb[0].mxu0 %v30
    %v132 = vpop.f32.mrb[0].mxu0
    %v133 = vadd.f32 0.0, %v132
    %v134 = vpop.f32.mrb[0].mxu0
    %135 = vmatprep.mubr.f32.mxu0 0.0
    %136 = vmatmul.mubr.f32.gmra.mrb[0].mxu0 %v31
    %v137 = vpop.f32.mrb[0].mxu0
    %v138 = vadd.f32 0.0, %v137
    %v139 = vpop.f32.mrb[0].mxu0
    %140 = vmatprep.mubr.f32.mxu0 0.0
    %141 = vmatmul.mubr.f32.gmra.mrb[0].mxu0 %v32
    %v142 = vpop.f32.mrb[0].mxu0
    %v143 = vadd.f32 0.0, %v142
    %v144 = vpop.f32.mrb[0].mxu0
    %145 = vmatprep.mubr.f32.mxu0 0.0
    %146 = vmatmul.mubr.f32.gmra.mrb[0].mxu0 %v33
    %v147 = vpop.f32.mrb[0].mxu0
    %v148 = vadd.f32 0.0, %v147
    %v149 = vpop.f32.mrb[0].mxu0
    %150 = vmatprep.mubr.f32.mxu0 0.0
    %151 = vmatmul.mubr.f32.gmra.mrb[0].mxu0 %v34
    %v152 = vpop.f32.mrb[0].mxu0
    %v153 = vadd.f32 0.0, %v152
    %v154 = vpop.f32.mrb[0].mxu0
    %155 = vdwg.mxu0
    %v156 = vld [vmem:[%s2] sm:$0xff]
    %v157 = vld [vmem:[%s2 + $0x8] sm:$0xff]
    %v158 = vld [vmem:[%s2 + $0x10] sm:$0xff]
    %v159 = vld [vmem:[%s2 + $0x18] sm:$0xff]
    %v160 = vld [vmem:[%s2 + $0x20] sm:$0xff]
    %v161 = vld [vmem:[%s2 + $0x28] sm:$0xff]
    %v162 = vld [vmem:[%s2 + $0x30] sm:$0xff]
    %v163 = vld [vmem:[%s2 + $0x38] sm:$0xff]
    %v164 = vld [vmem:[%s2 + $0x40] sm:$0xff]
    %v165 = vld [vmem:[%s2 + $0x48] sm:$0xff]
    %v166 = vld [vmem:[%s2 + $0x50] sm:$0xff]
    %v167 = vld [vmem:[%s2 + $0x58] sm:$0xff]
    %v168 = vld [vmem:[%s2 + $0x60] sm:$0xff]
    %v169 = vld [vmem:[%s2 + $0x68] sm:$0xff]
    %v170 = vld [vmem:[%s2 + $0x70] sm:$0xff]
    %v171 = vld [vmem:[%s2 + $0x78] sm:$0xff]
    %172 = vmatprep.subr.mxu0 0.0
    %173 = vmatpush1.msra.mxu0 %v156
    %174 = vmatprep.subr.mxu0 0.0
    %175 = vmatpush1.msra.mxu0 %v157
    %176 = vmatprep.subr.mxu0 0.0
    %177 = vmatpush1.msra.mxu0 %v158
    %178 = vmatprep.subr.mxu0 0.0
    %179 = vmatpush1.msra.mxu0 %v159
    %180 = vmatprep.subr.mxu0 0.0
    %181 = vmatpush1.msra.mxu0 %v160
    %182 = vmatprep.subr.mxu0 0.0
    %183 = vmatpush1.msra.mxu0 %v161
    %184 = vmatprep.subr.mxu0 0.0
    %185 = vmatpush1.msra.mxu0 %v162
    %186 = vmatprep.subr.mxu0 0.0
    %187 = vmatpush1.msra.mxu0 %v163
    %188 = vmatprep.subr.mxu0 0.0
    %189 = vmatpush1.msra.mxu0 %v164
    %190 = vmatprep.subr.mxu0 0.0
    %191 = vmatpush1.msra.mxu0 %v165
    %192 = vmatprep.subr.mxu0 0.0
    %193 = vmatpush1.msra.mxu0 %v166
    %194 = vmatprep.subr.mxu0 0.0
    %195 = vmatpush1.msra.mxu0 %v167
    %196 = vmatprep.subr.mxu0 0.0
    %197 = vmatpush1.msra.mxu0 %v168
    %198 = vmatprep.subr.mxu0 0.0
    %199 = vmatpush1.msra.mxu0 %v169
    %200 = vmatprep.subr.mxu0 0.0
    %201 = vmatpush1.msra.mxu0 %v170
    %202 = vmatprep.subr.mxu0 0.0
    %203 = vmatpush1.msra.mxu0 %v171
    %204 = vmatprep.subr.mxu0 0.0
    %205 = vmatpush1.msra.mxu0 0.0
    %206 = vmatprep.subr.mxu0 0.0
    %207 = vmatpush1.msra.mxu0 0.0
    %208 = vmatprep.subr.mxu0 0.0
    %209 = vmatpush1.msra.mxu0 0.0
    %210 = vmatprep.subr.mxu0 0.0
    %211 = vmatpush1.msra.mxu0 0.0
    %212 = vmatprep.subr.mxu0 0.0
    %213 = vmatpush1.msra.mxu0 0.0
    %214 = vmatprep.subr.mxu0 0.0
    %215 = vmatpush1.msra.mxu0 0.0
    %216 = vmatprep.subr.mxu0 0.0
    %217 = vmatpush1.msra.mxu0 0.0
    %218 = vmatprep.subr.mxu0 0.0
    %219 = vmatpush1.msra.mxu0 0.0
    %220 = vmatprep.subr.mxu0 0.0
    %221 = vmatpush1.msra.mxu0 0.0
    %222 = vmatprep.subr.mxu0 0.0
    %223 = vmatpush1.msra.mxu0 0.0
    %224 = vmatprep.subr.mxu0 0.0
    %225 = vmatpush1.msra.mxu0 0.0
    %226 = vmatprep.subr.mxu0 0.0
    %227 = vmatpush1.msra.mxu0 0.0
    %228 = vmatprep.subr.mxu0 0.0
    %229 = vmatpush1.msra.mxu0 0.0
    %230 = vmatprep.subr.mxu0 0.0
    %231 = vmatpush1.msra.mxu0 0.0
    %232 = vmatprep.subr.mxu0 0.0
    %233 = vmatpush1.msra.mxu0 0.0
    %234 = vmatprep.subr.mxu0 0.0
    %235 = vmatpush1.msra.mxu0 0.0
    %236 = vmatprep.mubr.f32.mxu0 0.0
    %237 = vmatmul.mubr.f32.gmra.mrb[0].mxu0 %v27
    %v238 = vpop.f32.mrb[0].mxu0
    %v239 = vadd.f32 0.0, %v238
    %v240 = vpop.f32.mrb[0].mxu0
    %241 = vmatprep.mubr.f32.mxu0 0.0
    %242 = vmatmul.mubr.f32.gmra.mrb[0].mxu0 %v28
    %v243 = vpop.f32.mrb[0].mxu0
    %v244 = vadd.f32 0.0, %v243
    %v245 = vpop.f32.mrb[0].mxu0
    %246 = vmatprep.mubr.f32.mxu0 0.0
    %247 = vmatmul.mubr.f32.gmra.mrb[0].mxu0 %v29
    %v248 = vpop.f32.mrb[0].mxu0
    %v249 = vadd.f32 0.0, %v248
    %v250 = vpop.f32.mrb[0].mxu0
    %251 = vmatprep.mubr.f32.mxu0 0.0
    %252 = vmatmul.mubr.f32.gmra.mrb[0].mxu0 %v30
    %v253 = vpop.f32.mrb[0].mxu0
    %v254 = vadd.f32 0.0, %v253
    %v255 = vpop.f32.mrb[0].mxu0
    %256 = vmatprep.mubr.f32.mxu0 0.0
    %257 = vmatmul.mubr.f32.gmra.mrb[0].mxu0 %v31
    %v258 = vpop.f32.mrb[0].mxu0
    %v259 = vadd.f32 0.0, %v258
    %v260 = vpop.f32.mrb[0].mxu0
    %261 = vmatprep.mubr.f32.mxu0 0.0
    %262 = vmatmul.mubr.f32.gmra.mrb[0].mxu0 %v32
    %v263 = vpop.f32.mrb[0].mxu0
    %v264 = vadd.f32 0.0, %v263
    %v265 = vpop.f32.mrb[0].mxu0
    %266 = vmatprep.mubr.f32.mxu0 0.0
    %267 = vmatmul.mubr.f32.gmra.mrb[0].mxu0 %v33
    %v268 = vpop.f32.mrb[0].mxu0
    %v269 = vadd.f32 0.0, %v268
    %v270 = vpop.f32.mrb[0].mxu0
    %271 = vmatprep.mubr.f32.mxu0 0.0
    %272 = vmatmul.mubr.f32.gmra.mrb[0].mxu0 %v34
    %v273 = vpop.f32.mrb[0].mxu0
    %v274 = vadd.f32 0.0, %v273
    %v275 = vpop.f32.mrb[0].mxu0
    %276 = vdwg.mxu0
    %v277 = vld [vmem:[%s3] sm:$0xff]
    %v278 = vld [vmem:[%s3 + $0x8] sm:$0xff]
    %v279 = vld [vmem:[%s3 + $0x10] sm:$0xff]
    %v280 = vld [vmem:[%s3 + $0x18] sm:$0xff]
    %v281 = vld [vmem:[%s3 + $0x20] sm:$0xff]
    %v282 = vld [vmem:[%s3 + $0x28] sm:$0xff]
    %v283 = vld [vmem:[%s3 + $0x30] sm:$0xff]
    %v284 = vld [vmem:[%s3 + $0x38] sm:$0xff]
    %v285 = vld [vmem:[%s4] sm:$0xff]
    %v286 = vld [vmem:[%s4 + $0x8] sm:$0xff]
    %v287 = vld [vmem:[%s4 + $0x10] sm:$0xff]
    %v288 = vld [vmem:[%s4 + $0x18] sm:$0xff]
    %v289 = vld [vmem:[%s4 + $0x20] sm:$0xff]
    %v290 = vld [vmem:[%s4 + $0x28] sm:$0xff]
    %v291 = vld [vmem:[%s4 + $0x30] sm:$0xff]
    %v292 = vld [vmem:[%s4 + $0x38] sm:$0xff]
    %v293 = vlaneseq
    %v294 = vshrl.u32 %v293, 7
    %v295 = vsub.s32 0, %v294
    %v296 = vrot.slane %v118, %v295
    %v297 = vlaneseq
    %v298 = vshrl.u32 %v297, 7
    %v299 = vsub.s32 0, %v298
    %v300 = vrot.slane %v123, %v299
    %v301 = vlaneseq
    %v302 = vshrl.u32 %v301, 7
    %v303 = vsub.s32 0, %v302
    %v304 = vrot.slane %v128, %v303
    %v305 = vlaneseq
    %v306 = vshrl.u32 %v305, 7
    %v307 = vsub.s32 0, %v306
    %v308 = vrot.slane %v133, %v307
    %v309 = vlaneseq
    %v310 = vshrl.u32 %v309, 7
    %v311 = vsub.s32 0, %v310
    %v312 = vrot.slane %v138, %v311
    %v313 = vlaneseq
    %v314 = vshrl.u32 %v313, 7
    %v315 = vsub.s32 0, %v314
    %v316 = vrot.slane %v143, %v315
    %v317 = vlaneseq
    %v318 = vshrl.u32 %v317, 7
    %v319 = vsub.s32 0, %v318
    %v320 = vrot.slane %v148, %v319
    %v321 = vlaneseq
    %v322 = vshrl.u32 %v321, 7
    %v323 = vsub.s32 0, %v322
    %v324 = vrot.slane %v153, %v323
    %v325 = vmul.f32 %v296, %v277
    %v326 = vmul.f32 %v300, %v277
    %v327 = vmul.f32 %v304, %v277
    %v328 = vmul.f32 %v308, %v277
    %v329 = vmul.f32 %v312, %v277
    %v330 = vmul.f32 %v316, %v277
    %v331 = vmul.f32 %v320, %v277
    %v332 = vmul.f32 %v324, %v277
    %v333 = vadd.f32 %v325, 0.0
    %v334 = vadd.f32 %v326, 0.0
    %v335 = vadd.f32 %v327, 0.0
    %v336 = vadd.f32 %v328, 0.0
    %v337 = vadd.f32 %v329, 0.0
    %v338 = vadd.f32 %v330, 0.0
    %v339 = vadd.f32 %v331, 0.0
    %v340 = vadd.f32 %v332, 0.0
    %v341 = vlaneseq
    %v342 = vshrl.u32 %v341, 7
    %v343 = vsub.s32 0, %v342
    %v344 = vrot.slane %v239, %v343
    %v345 = vlaneseq
    %v346 = vshrl.u32 %v345, 7
    %v347 = vsub.s32 0, %v346
    %v348 = vrot.slane %v244, %v347
    %v349 = vlaneseq
    %v350 = vshrl.u32 %v349, 7
    %v351 = vsub.s32 0, %v350
    %v352 = vrot.slane %v249, %v351
    %v353 = vlaneseq
    %v354 = vshrl.u32 %v353, 7
    %v355 = vsub.s32 0, %v354
    %v356 = vrot.slane %v254, %v355
    %v357 = vlaneseq
    %v358 = vshrl.u32 %v357, 7
    %v359 = vsub.s32 0, %v358
    %v360 = vrot.slane %v259, %v359
    %v361 = vlaneseq
    %v362 = vshrl.u32 %v361, 7
    %v363 = vsub.s32 0, %v362
    %v364 = vrot.slane %v264, %v363
    %v365 = vlaneseq
    %v366 = vshrl.u32 %v365, 7
    %v367 = vsub.s32 0, %v366
    %v368 = vrot.slane %v269, %v367
    %v369 = vlaneseq
    %v370 = vshrl.u32 %v369, 7
    %v371 = vsub.s32 0, %v370
    %v372 = vrot.slane %v274, %v371
    %v373 = vmul.f32 %v344, %v285
    %v374 = vmul.f32 %v348, %v285
    %v375 = vmul.f32 %v352, %v285
    %v376 = vmul.f32 %v356, %v285
    %v377 = vmul.f32 %v360, %v285
    %v378 = vmul.f32 %v364, %v285
    %v379 = vmul.f32 %v368, %v285
    %v380 = vmul.f32 %v372, %v285
    %v381 = vsub.f32 %v333, %v373
    %v382 = vsub.f32 %v334, %v374
    %v383 = vsub.f32 %v335, %v375
    %v384 = vsub.f32 %v336, %v376
    %v385 = vsub.f32 %v337, %v377
    %v386 = vsub.f32 %v338, %v378
    %v387 = vsub.f32 %v339, %v379
    %v388 = vsub.f32 %v340, %v380
    %v389 = vmul.f32 %v296, %v285
    %v390 = vmul.f32 %v300, %v285
    %v391 = vmul.f32 %v304, %v285
    %v392 = vmul.f32 %v308, %v285
    %v393 = vmul.f32 %v312, %v285
    %v394 = vmul.f32 %v316, %v285
    %v395 = vmul.f32 %v320, %v285
    %v396 = vmul.f32 %v324, %v285
    %v397 = vadd.f32 %v389, 0.0
    %v398 = vadd.f32 %v390, 0.0
    %v399 = vadd.f32 %v391, 0.0
    %v400 = vadd.f32 %v392, 0.0
    %v401 = vadd.f32 %v393, 0.0
    %v402 = vadd.f32 %v394, 0.0
    %v403 = vadd.f32 %v395, 0.0
    %v404 = vadd.f32 %v396, 0.0
    %v405 = vmul.f32 %v344, %v277
    %v406 = vmul.f32 %v348, %v277
    %v407 = vmul.f32 %v352, %v277
    %v408 = vmul.f32 %v356, %v277
    %v409 = vmul.f32 %v360, %v277
    %v410 = vmul.f32 %v364, %v277
    %v411 = vmul.f32 %v368, %v277
    %v412 = vmul.f32 %v372, %v277
    %v413 = vadd.f32 %v397, %v405
    %v414 = vadd.f32 %v398, %v406
    %v415 = vadd.f32 %v399, %v407
    %v416 = vadd.f32 %v400, %v408
    %v417 = vadd.f32 %v401, %v409
    %v418 = vadd.f32 %v402, %v410
    %v419 = vadd.f32 %v403, %v411
    %v420 = vadd.f32 %v404, %v412
    %v421 = vlaneseq
    %v422 = vshrl.u32 %v421, 7
    %v423 = vsub.s32 1, %v422
    %v424 = vrot.slane %v118, %v423
    %v425 = vlaneseq
    %v426 = vshrl.u32 %v425, 7
    %v427 = vsub.s32 1, %v426
    %v428 = vrot.slane %v123, %v427
    %v429 = vlaneseq
    %v430 = vshrl.u32 %v429, 7
    %v431 = vsub.s32 1, %v430
    %v432 = vrot.slane %v128, %v431
    %v433 = vlaneseq
    %v434 = vshrl.u32 %v433, 7
    %v435 = vsub.s32 1, %v434
    %v436 = vrot.slane %v133, %v435
    %v437 = vlaneseq
    %v438 = vshrl.u32 %v437, 7
    %v439 = vsub.s32 1, %v438
    %v440 = vrot.slane %v138, %v439
    %v441 = vlaneseq
    %v442 = vshrl.u32 %v441, 7
    %v443 = vsub.s32 1, %v442
    %v444 = vrot.slane %v143, %v443
    %v445 = vlaneseq
    %v446 = vshrl.u32 %v445, 7
    %v447 = vsub.s32 1, %v446
    %v448 = vrot.slane %v148, %v447
    %v449 = vlaneseq
    %v450 = vshrl.u32 %v449, 7
    %v451 = vsub.s32 1, %v450
    %v452 = vrot.slane %v153, %v451
    %v453 = vmul.f32 %v424, %v278
    %v454 = vmul.f32 %v428, %v278
    %v455 = vmul.f32 %v432, %v278
    %v456 = vmul.f32 %v436, %v278
    %v457 = vmul.f32 %v440, %v278
    %v458 = vmul.f32 %v444, %v278
    %v459 = vmul.f32 %v448, %v278
    %v460 = vmul.f32 %v452, %v278
    %v461 = vadd.f32 %v381, %v453
    %v462 = vadd.f32 %v382, %v454
    %v463 = vadd.f32 %v383, %v455
    %v464 = vadd.f32 %v384, %v456
    %v465 = vadd.f32 %v385, %v457
    %v466 = vadd.f32 %v386, %v458
    %v467 = vadd.f32 %v387, %v459
    %v468 = vadd.f32 %v388, %v460
    %v469 = vlaneseq
    %v470 = vshrl.u32 %v469, 7
    %v471 = vsub.s32 1, %v470
    %v472 = vrot.slane %v239, %v471
    %v473 = vlaneseq
    %v474 = vshrl.u32 %v473, 7
    %v475 = vsub.s32 1, %v474
    %v476 = vrot.slane %v244, %v475
    %v477 = vlaneseq
    %v478 = vshrl.u32 %v477, 7
    %v479 = vsub.s32 1, %v478
    %v480 = vrot.slane %v249, %v479
    %v481 = vlaneseq
    %v482 = vshrl.u32 %v481, 7
    %v483 = vsub.s32 1, %v482
    %v484 = vrot.slane %v254, %v483
    %v485 = vlaneseq
    %v486 = vshrl.u32 %v485, 7
    %v487 = vsub.s32 1, %v486
    %v488 = vrot.slane %v259, %v487
    %v489 = vlaneseq
    %v490 = vshrl.u32 %v489, 7
    %v491 = vsub.s32 1, %v490
    %v492 = vrot.slane %v264, %v491
    %v493 = vlaneseq
    %v494 = vshrl.u32 %v493, 7
    %v495 = vsub.s32 1, %v494
    %v496 = vrot.slane %v269, %v495
    %v497 = vlaneseq
    %v498 = vshrl.u32 %v497, 7
    %v499 = vsub.s32 1, %v498
    %v500 = vrot.slane %v274, %v499
    %v501 = vmul.f32 %v472, %v286
    %v502 = vmul.f32 %v476, %v286
    %v503 = vmul.f32 %v480, %v286
    %v504 = vmul.f32 %v484, %v286
    %v505 = vmul.f32 %v488, %v286
    %v506 = vmul.f32 %v492, %v286
    %v507 = vmul.f32 %v496, %v286
    %v508 = vmul.f32 %v500, %v286
    %v509 = vsub.f32 %v461, %v501
    %v510 = vsub.f32 %v462, %v502
    %v511 = vsub.f32 %v463, %v503
    %v512 = vsub.f32 %v464, %v504
    %v513 = vsub.f32 %v465, %v505
    %v514 = vsub.f32 %v466, %v506
    %v515 = vsub.f32 %v467, %v507
    %v516 = vsub.f32 %v468, %v508
    %v517 = vmul.f32 %v424, %v286
    %v518 = vmul.f32 %v428, %v286
    %v519 = vmul.f32 %v432, %v286
    %v520 = vmul.f32 %v436, %v286
    %v521 = vmul.f32 %v440, %v286
    %v522 = vmul.f32 %v444, %v286
    %v523 = vmul.f32 %v448, %v286
    %v524 = vmul.f32 %v452, %v286
    %v525 = vadd.f32 %v413, %v517
    %v526 = vadd.f32 %v414, %v518
    %v527 = vadd.f32 %v415, %v519
    %v528 = vadd.f32 %v416, %v520
    %v529 = vadd.f32 %v417, %v521
    %v530 = vadd.f32 %v418, %v522
    %v531 = vadd.f32 %v419, %v523
    %v532 = vadd.f32 %v420, %v524
    %v533 = vmul.f32 %v472, %v278
    %v534 = vmul.f32 %v476, %v278
    %v535 = vmul.f32 %v480, %v278
    %v536 = vmul.f32 %v484, %v278
    %v537 = vmul.f32 %v488, %v278
    %v538 = vmul.f32 %v492, %v278
    %v539 = vmul.f32 %v496, %v278
    %v540 = vmul.f32 %v500, %v278
    %v541 = vadd.f32 %v525, %v533
    %v542 = vadd.f32 %v526, %v534
    %v543 = vadd.f32 %v527, %v535
    %v544 = vadd.f32 %v528, %v536
    %v545 = vadd.f32 %v529, %v537
    %v546 = vadd.f32 %v530, %v538
    %v547 = vadd.f32 %v531, %v539
    %v548 = vadd.f32 %v532, %v540
    %v549 = vlaneseq
    %v550 = vshrl.u32 %v549, 7
    %v551 = vsub.s32 2, %v550
    %v552 = vrot.slane %v118, %v551
    %v553 = vlaneseq
    %v554 = vshrl.u32 %v553, 7
    %v555 = vsub.s32 2, %v554
    %v556 = vrot.slane %v123, %v555
    %v557 = vlaneseq
    %v558 = vshrl.u32 %v557, 7
    %v559 = vsub.s32 2, %v558
    %v560 = vrot.slane %v128, %v559
    %v561 = vlaneseq
    %v562 = vshrl.u32 %v561, 7
    %v563 = vsub.s32 2, %v562
    %v564 = vrot.slane %v133, %v563
    %v565 = vlaneseq
    %v566 = vshrl.u32 %v565, 7
    %v567 = vsub.s32 2, %v566
    %v568 = vrot.slane %v138, %v567
    %v569 = vlaneseq
    %v570 = vshrl.u32 %v569, 7
    %v571 = vsub.s32 2, %v570
    %v572 = vrot.slane %v143, %v571
    %v573 = vlaneseq
    %v574 = vshrl.u32 %v573, 7
    %v575 = vsub.s32 2, %v574
    %v576 = vrot.slane %v148, %v575
    %v577 = vlaneseq
    %v578 = vshrl.u32 %v577, 7
    %v579 = vsub.s32 2, %v578
    %v580 = vrot.slane %v153, %v579
    %v581 = vmul.f32 %v552, %v279
    %v582 = vmul.f32 %v556, %v279
    %v583 = vmul.f32 %v560, %v279
    %v584 = vmul.f32 %v564, %v279
    %v585 = vmul.f32 %v568, %v279
    %v586 = vmul.f32 %v572, %v279
    %v587 = vmul.f32 %v576, %v279
    %v588 = vmul.f32 %v580, %v279
    %v589 = vadd.f32 %v509, %v581
    %v590 = vadd.f32 %v510, %v582
    %v591 = vadd.f32 %v511, %v583
    %v592 = vadd.f32 %v512, %v584
    %v593 = vadd.f32 %v513, %v585
    %v594 = vadd.f32 %v514, %v586
    %v595 = vadd.f32 %v515, %v587
    %v596 = vadd.f32 %v516, %v588
    %v597 = vlaneseq
    %v598 = vshrl.u32 %v597, 7
    %v599 = vsub.s32 2, %v598
    %v600 = vrot.slane %v239, %v599
    %v601 = vlaneseq
    %v602 = vshrl.u32 %v601, 7
    %v603 = vsub.s32 2, %v602
    %v604 = vrot.slane %v244, %v603
    %v605 = vlaneseq
    %v606 = vshrl.u32 %v605, 7
    %v607 = vsub.s32 2, %v606
    %v608 = vrot.slane %v249, %v607
    %v609 = vlaneseq
    %v610 = vshrl.u32 %v609, 7
    %v611 = vsub.s32 2, %v610
    %v612 = vrot.slane %v254, %v611
    %v613 = vlaneseq
    %v614 = vshrl.u32 %v613, 7
    %v615 = vsub.s32 2, %v614
    %v616 = vrot.slane %v259, %v615
    %v617 = vlaneseq
    %v618 = vshrl.u32 %v617, 7
    %v619 = vsub.s32 2, %v618
    %v620 = vrot.slane %v264, %v619
    %v621 = vlaneseq
    %v622 = vshrl.u32 %v621, 7
    %v623 = vsub.s32 2, %v622
    %v624 = vrot.slane %v269, %v623
    %v625 = vlaneseq
    %v626 = vshrl.u32 %v625, 7
    %v627 = vsub.s32 2, %v626
    %v628 = vrot.slane %v274, %v627
    %v629 = vmul.f32 %v600, %v287
    %v630 = vmul.f32 %v604, %v287
    %v631 = vmul.f32 %v608, %v287
    %v632 = vmul.f32 %v612, %v287
    %v633 = vmul.f32 %v616, %v287
    %v634 = vmul.f32 %v620, %v287
    %v635 = vmul.f32 %v624, %v287
    %v636 = vmul.f32 %v628, %v287
    %v637 = vsub.f32 %v589, %v629
    %v638 = vsub.f32 %v590, %v630
    %v639 = vsub.f32 %v591, %v631
    %v640 = vsub.f32 %v592, %v632
    %v641 = vsub.f32 %v593, %v633
    %v642 = vsub.f32 %v594, %v634
    %v643 = vsub.f32 %v595, %v635
    %v644 = vsub.f32 %v596, %v636
    %v645 = vmul.f32 %v552, %v287
    %v646 = vmul.f32 %v556, %v287
    %v647 = vmul.f32 %v560, %v287
    %v648 = vmul.f32 %v564, %v287
    %v649 = vmul.f32 %v568, %v287
    %v650 = vmul.f32 %v572, %v287
    %v651 = vmul.f32 %v576, %v287
    %v652 = vmul.f32 %v580, %v287
    %v653 = vadd.f32 %v541, %v645
    %v654 = vadd.f32 %v542, %v646
    %v655 = vadd.f32 %v543, %v647
    %v656 = vadd.f32 %v544, %v648
    %v657 = vadd.f32 %v545, %v649
    %v658 = vadd.f32 %v546, %v650
    %v659 = vadd.f32 %v547, %v651
    %v660 = vadd.f32 %v548, %v652
    %v661 = vmul.f32 %v600, %v279
    %v662 = vmul.f32 %v604, %v279
    %v663 = vmul.f32 %v608, %v279
    %v664 = vmul.f32 %v612, %v279
    %v665 = vmul.f32 %v616, %v279
    %v666 = vmul.f32 %v620, %v279
    %v667 = vmul.f32 %v624, %v279
    %v668 = vmul.f32 %v628, %v279
    %v669 = vadd.f32 %v653, %v661
    %v670 = vadd.f32 %v654, %v662
    %v671 = vadd.f32 %v655, %v663
    %v672 = vadd.f32 %v656, %v664
    %v673 = vadd.f32 %v657, %v665
    %v674 = vadd.f32 %v658, %v666
    %v675 = vadd.f32 %v659, %v667
    %v676 = vadd.f32 %v660, %v668
    %v677 = vlaneseq
    %v678 = vshrl.u32 %v677, 7
    %v679 = vsub.s32 3, %v678
    %v680 = vrot.slane %v118, %v679
    %v681 = vlaneseq
    %v682 = vshrl.u32 %v681, 7
    %v683 = vsub.s32 3, %v682
    %v684 = vrot.slane %v123, %v683
    %v685 = vlaneseq
    %v686 = vshrl.u32 %v685, 7
    %v687 = vsub.s32 3, %v686
    %v688 = vrot.slane %v128, %v687
    %v689 = vlaneseq
    %v690 = vshrl.u32 %v689, 7
    %v691 = vsub.s32 3, %v690
    %v692 = vrot.slane %v133, %v691
    %v693 = vlaneseq
    %v694 = vshrl.u32 %v693, 7
    %v695 = vsub.s32 3, %v694
    %v696 = vrot.slane %v138, %v695
    %v697 = vlaneseq
    %v698 = vshrl.u32 %v697, 7
    %v699 = vsub.s32 3, %v698
    %v700 = vrot.slane %v143, %v699
    %v701 = vlaneseq
    %v702 = vshrl.u32 %v701, 7
    %v703 = vsub.s32 3, %v702
    %v704 = vrot.slane %v148, %v703
    %v705 = vlaneseq
    %v706 = vshrl.u32 %v705, 7
    %v707 = vsub.s32 3, %v706
    %v708 = vrot.slane %v153, %v707
    %v709 = vmul.f32 %v680, %v280
    %v710 = vmul.f32 %v684, %v280
    %v711 = vmul.f32 %v688, %v280
    %v712 = vmul.f32 %v692, %v280
    %v713 = vmul.f32 %v696, %v280
    %v714 = vmul.f32 %v700, %v280
    %v715 = vmul.f32 %v704, %v280
    %v716 = vmul.f32 %v708, %v280
    %v717 = vadd.f32 %v637, %v709
    %v718 = vadd.f32 %v638, %v710
    %v719 = vadd.f32 %v639, %v711
    %v720 = vadd.f32 %v640, %v712
    %v721 = vadd.f32 %v641, %v713
    %v722 = vadd.f32 %v642, %v714
    %v723 = vadd.f32 %v643, %v715
    %v724 = vadd.f32 %v644, %v716
    %v725 = vlaneseq
    %v726 = vshrl.u32 %v725, 7
    %v727 = vsub.s32 3, %v726
    %v728 = vrot.slane %v239, %v727
    %v729 = vlaneseq
    %v730 = vshrl.u32 %v729, 7
    %v731 = vsub.s32 3, %v730
    %v732 = vrot.slane %v244, %v731
    %v733 = vlaneseq
    %v734 = vshrl.u32 %v733, 7
    %v735 = vsub.s32 3, %v734
    %v736 = vrot.slane %v249, %v735
    %v737 = vlaneseq
    %v738 = vshrl.u32 %v737, 7
    %v739 = vsub.s32 3, %v738
    %v740 = vrot.slane %v254, %v739
    %v741 = vlaneseq
    %v742 = vshrl.u32 %v741, 7
    %v743 = vsub.s32 3, %v742
    %v744 = vrot.slane %v259, %v743
    %v745 = vlaneseq
    %v746 = vshrl.u32 %v745, 7
    %v747 = vsub.s32 3, %v746
    %v748 = vrot.slane %v264, %v747
    %v749 = vlaneseq
    %v750 = vshrl.u32 %v749, 7
    %v751 = vsub.s32 3, %v750
    %v752 = vrot.slane %v269, %v751
    %v753 = vlaneseq
    %v754 = vshrl.u32 %v753, 7
    %v755 = vsub.s32 3, %v754
    %v756 = vrot.slane %v274, %v755
    %v757 = vmul.f32 %v728, %v288
    %v758 = vmul.f32 %v732, %v288
    %v759 = vmul.f32 %v736, %v288
    %v760 = vmul.f32 %v740, %v288
    %v761 = vmul.f32 %v744, %v288
    %v762 = vmul.f32 %v748, %v288
    %v763 = vmul.f32 %v752, %v288
    %v764 = vmul.f32 %v756, %v288
    %v765 = vsub.f32 %v717, %v757
    %v766 = vsub.f32 %v718, %v758
    %v767 = vsub.f32 %v719, %v759
    %v768 = vsub.f32 %v720, %v760
    %v769 = vsub.f32 %v721, %v761
    %v770 = vsub.f32 %v722, %v762
    %v771 = vsub.f32 %v723, %v763
    %v772 = vsub.f32 %v724, %v764
    %v773 = vmul.f32 %v680, %v288
    %v774 = vmul.f32 %v684, %v288
    %v775 = vmul.f32 %v688, %v288
    %v776 = vmul.f32 %v692, %v288
    %v777 = vmul.f32 %v696, %v288
    %v778 = vmul.f32 %v700, %v288
    %v779 = vmul.f32 %v704, %v288
    %v780 = vmul.f32 %v708, %v288
    %v781 = vadd.f32 %v669, %v773
    %v782 = vadd.f32 %v670, %v774
    %v783 = vadd.f32 %v671, %v775
    %v784 = vadd.f32 %v672, %v776
    %v785 = vadd.f32 %v673, %v777
    %v786 = vadd.f32 %v674, %v778
    %v787 = vadd.f32 %v675, %v779
    %v788 = vadd.f32 %v676, %v780
    %v789 = vmul.f32 %v728, %v280
    %v790 = vmul.f32 %v732, %v280
    %v791 = vmul.f32 %v736, %v280
    %v792 = vmul.f32 %v740, %v280
    %v793 = vmul.f32 %v744, %v280
    %v794 = vmul.f32 %v748, %v280
    %v795 = vmul.f32 %v752, %v280
    %v796 = vmul.f32 %v756, %v280
    %v797 = vadd.f32 %v781, %v789
    %v798 = vadd.f32 %v782, %v790
    %v799 = vadd.f32 %v783, %v791
    %v800 = vadd.f32 %v784, %v792
    %v801 = vadd.f32 %v785, %v793
    %v802 = vadd.f32 %v786, %v794
    %v803 = vadd.f32 %v787, %v795
    %v804 = vadd.f32 %v788, %v796
    %v805 = vlaneseq
    %v806 = vshrl.u32 %v805, 7
    %v807 = vsub.s32 4, %v806
    %v808 = vrot.slane %v118, %v807
    %v809 = vlaneseq
    %v810 = vshrl.u32 %v809, 7
    %v811 = vsub.s32 4, %v810
    %v812 = vrot.slane %v123, %v811
    %v813 = vlaneseq
    %v814 = vshrl.u32 %v813, 7
    %v815 = vsub.s32 4, %v814
    %v816 = vrot.slane %v128, %v815
    %v817 = vlaneseq
    %v818 = vshrl.u32 %v817, 7
    %v819 = vsub.s32 4, %v818
    %v820 = vrot.slane %v133, %v819
    %v821 = vlaneseq
    %v822 = vshrl.u32 %v821, 7
    %v823 = vsub.s32 4, %v822
    %v824 = vrot.slane %v138, %v823
    %v825 = vlaneseq
    %v826 = vshrl.u32 %v825, 7
    %v827 = vsub.s32 4, %v826
    %v828 = vrot.slane %v143, %v827
    %v829 = vlaneseq
    %v830 = vshrl.u32 %v829, 7
    %v831 = vsub.s32 4, %v830
    %v832 = vrot.slane %v148, %v831
    %v833 = vlaneseq
    %v834 = vshrl.u32 %v833, 7
    %v835 = vsub.s32 4, %v834
    %v836 = vrot.slane %v153, %v835
    %v837 = vmul.f32 %v808, %v281
    %v838 = vmul.f32 %v812, %v281
    %v839 = vmul.f32 %v816, %v281
    %v840 = vmul.f32 %v820, %v281
    %v841 = vmul.f32 %v824, %v281
    %v842 = vmul.f32 %v828, %v281
    %v843 = vmul.f32 %v832, %v281
    %v844 = vmul.f32 %v836, %v281
    %v845 = vadd.f32 %v765, %v837
    %v846 = vadd.f32 %v766, %v838
    %v847 = vadd.f32 %v767, %v839
    %v848 = vadd.f32 %v768, %v840
    %v849 = vadd.f32 %v769, %v841
    %v850 = vadd.f32 %v770, %v842
    %v851 = vadd.f32 %v771, %v843
    %v852 = vadd.f32 %v772, %v844
    %v853 = vlaneseq
    %v854 = vshrl.u32 %v853, 7
    %v855 = vsub.s32 4, %v854
    %v856 = vrot.slane %v239, %v855
    %v857 = vlaneseq
    %v858 = vshrl.u32 %v857, 7
    %v859 = vsub.s32 4, %v858
    %v860 = vrot.slane %v244, %v859
    %v861 = vlaneseq
    %v862 = vshrl.u32 %v861, 7
    %v863 = vsub.s32 4, %v862
    %v864 = vrot.slane %v249, %v863
    %v865 = vlaneseq
    %v866 = vshrl.u32 %v865, 7
    %v867 = vsub.s32 4, %v866
    %v868 = vrot.slane %v254, %v867
    %v869 = vlaneseq
    %v870 = vshrl.u32 %v869, 7
    %v871 = vsub.s32 4, %v870
    %v872 = vrot.slane %v259, %v871
    %v873 = vlaneseq
    %v874 = vshrl.u32 %v873, 7
    %v875 = vsub.s32 4, %v874
    %v876 = vrot.slane %v264, %v875
    %v877 = vlaneseq
    %v878 = vshrl.u32 %v877, 7
    %v879 = vsub.s32 4, %v878
    %v880 = vrot.slane %v269, %v879
    %v881 = vlaneseq
    %v882 = vshrl.u32 %v881, 7
    %v883 = vsub.s32 4, %v882
    %v884 = vrot.slane %v274, %v883
    %v885 = vmul.f32 %v856, %v289
    %v886 = vmul.f32 %v860, %v289
    %v887 = vmul.f32 %v864, %v289
    %v888 = vmul.f32 %v868, %v289
    %v889 = vmul.f32 %v872, %v289
    %v890 = vmul.f32 %v876, %v289
    %v891 = vmul.f32 %v880, %v289
    %v892 = vmul.f32 %v884, %v289
    %v893 = vsub.f32 %v845, %v885
    %v894 = vsub.f32 %v846, %v886
    %v895 = vsub.f32 %v847, %v887
    %v896 = vsub.f32 %v848, %v888
    %v897 = vsub.f32 %v849, %v889
    %v898 = vsub.f32 %v850, %v890
    %v899 = vsub.f32 %v851, %v891
    %v900 = vsub.f32 %v852, %v892
    %v901 = vmul.f32 %v808, %v289
    %v902 = vmul.f32 %v812, %v289
    %v903 = vmul.f32 %v816, %v289
    %v904 = vmul.f32 %v820, %v289
    %v905 = vmul.f32 %v824, %v289
    %v906 = vmul.f32 %v828, %v289
    %v907 = vmul.f32 %v832, %v289
    %v908 = vmul.f32 %v836, %v289
    %v909 = vadd.f32 %v797, %v901
    %v910 = vadd.f32 %v798, %v902
    %v911 = vadd.f32 %v799, %v903
    %v912 = vadd.f32 %v800, %v904
    %v913 = vadd.f32 %v801, %v905
    %v914 = vadd.f32 %v802, %v906
    %v915 = vadd.f32 %v803, %v907
    %v916 = vadd.f32 %v804, %v908
    %v917 = vmul.f32 %v856, %v281
    %v918 = vmul.f32 %v860, %v281
    %v919 = vmul.f32 %v864, %v281
    %v920 = vmul.f32 %v868, %v281
    %v921 = vmul.f32 %v872, %v281
    %v922 = vmul.f32 %v876, %v281
    %v923 = vmul.f32 %v880, %v281
    %v924 = vmul.f32 %v884, %v281
    %v925 = vadd.f32 %v909, %v917
    %v926 = vadd.f32 %v910, %v918
    %v927 = vadd.f32 %v911, %v919
    %v928 = vadd.f32 %v912, %v920
    %v929 = vadd.f32 %v913, %v921
    %v930 = vadd.f32 %v914, %v922
    %v931 = vadd.f32 %v915, %v923
    %v932 = vadd.f32 %v916, %v924
    %v933 = vlaneseq
    %v934 = vshrl.u32 %v933, 7
    %v935 = vsub.s32 5, %v934
    %v936 = vrot.slane %v118, %v935
    %v937 = vlaneseq
    %v938 = vshrl.u32 %v937, 7
    %v939 = vsub.s32 5, %v938
    %v940 = vrot.slane %v123, %v939
    %v941 = vlaneseq
    %v942 = vshrl.u32 %v941, 7
    %v943 = vsub.s32 5, %v942
    %v944 = vrot.slane %v128, %v943
    %v945 = vlaneseq
    %v946 = vshrl.u32 %v945, 7
    %v947 = vsub.s32 5, %v946
    %v948 = vrot.slane %v133, %v947
    %v949 = vlaneseq
    %v950 = vshrl.u32 %v949, 7
    %v951 = vsub.s32 5, %v950
    %v952 = vrot.slane %v138, %v951
    %v953 = vlaneseq
    %v954 = vshrl.u32 %v953, 7
    %v955 = vsub.s32 5, %v954
    %v956 = vrot.slane %v143, %v955
    %v957 = vlaneseq
    %v958 = vshrl.u32 %v957, 7
    %v959 = vsub.s32 5, %v958
    %v960 = vrot.slane %v148, %v959
    %v961 = vlaneseq
    %v962 = vshrl.u32 %v961, 7
    %v963 = vsub.s32 5, %v962
    %v964 = vrot.slane %v153, %v963
    %v965 = vmul.f32 %v936, %v282
    %v966 = vmul.f32 %v940, %v282
    %v967 = vmul.f32 %v944, %v282
    %v968 = vmul.f32 %v948, %v282
    %v969 = vmul.f32 %v952, %v282
    %v970 = vmul.f32 %v956, %v282
    %v971 = vmul.f32 %v960, %v282
    %v972 = vmul.f32 %v964, %v282
    %v973 = vadd.f32 %v893, %v965
    %v974 = vadd.f32 %v894, %v966
    %v975 = vadd.f32 %v895, %v967
    %v976 = vadd.f32 %v896, %v968
    %v977 = vadd.f32 %v897, %v969
    %v978 = vadd.f32 %v898, %v970
    %v979 = vadd.f32 %v899, %v971
    %v980 = vadd.f32 %v900, %v972
    %v981 = vlaneseq
    %v982 = vshrl.u32 %v981, 7
    %v983 = vsub.s32 5, %v982
    %v984 = vrot.slane %v239, %v983
    %v985 = vlaneseq
    %v986 = vshrl.u32 %v985, 7
    %v987 = vsub.s32 5, %v986
    %v988 = vrot.slane %v244, %v987
    %v989 = vlaneseq
    %v990 = vshrl.u32 %v989, 7
    %v991 = vsub.s32 5, %v990
    %v992 = vrot.slane %v249, %v991
    %v993 = vlaneseq
    %v994 = vshrl.u32 %v993, 7
    %v995 = vsub.s32 5, %v994
    %v996 = vrot.slane %v254, %v995
    %v997 = vlaneseq
    %v998 = vshrl.u32 %v997, 7
    %v999 = vsub.s32 5, %v998
    %v1000 = vrot.slane %v259, %v999
    %v1001 = vlaneseq
    %v1002 = vshrl.u32 %v1001, 7
    %v1003 = vsub.s32 5, %v1002
    %v1004 = vrot.slane %v264, %v1003
    %v1005 = vlaneseq
    %v1006 = vshrl.u32 %v1005, 7
    %v1007 = vsub.s32 5, %v1006
    %v1008 = vrot.slane %v269, %v1007
    %v1009 = vlaneseq
    %v1010 = vshrl.u32 %v1009, 7
    %v1011 = vsub.s32 5, %v1010
    %v1012 = vrot.slane %v274, %v1011
    %v1013 = vmul.f32 %v984, %v290
    %v1014 = vmul.f32 %v988, %v290
    %v1015 = vmul.f32 %v992, %v290
    %v1016 = vmul.f32 %v996, %v290
    %v1017 = vmul.f32 %v1000, %v290
    %v1018 = vmul.f32 %v1004, %v290
    %v1019 = vmul.f32 %v1008, %v290
    %v1020 = vmul.f32 %v1012, %v290
    %v1021 = vsub.f32 %v973, %v1013
    %v1022 = vsub.f32 %v974, %v1014
    %v1023 = vsub.f32 %v975, %v1015
    %v1024 = vsub.f32 %v976, %v1016
    %v1025 = vsub.f32 %v977, %v1017
    %v1026 = vsub.f32 %v978, %v1018
    %v1027 = vsub.f32 %v979, %v1019
    %v1028 = vsub.f32 %v980, %v1020
    %v1029 = vmul.f32 %v936, %v290
    %v1030 = vmul.f32 %v940, %v290
    %v1031 = vmul.f32 %v944, %v290
    %v1032 = vmul.f32 %v948, %v290
    %v1033 = vmul.f32 %v952, %v290
    %v1034 = vmul.f32 %v956, %v290
    %v1035 = vmul.f32 %v960, %v290
    %v1036 = vmul.f32 %v964, %v290
    %v1037 = vadd.f32 %v925, %v1029
    %v1038 = vadd.f32 %v926, %v1030
    %v1039 = vadd.f32 %v927, %v1031
    %v1040 = vadd.f32 %v928, %v1032
    %v1041 = vadd.f32 %v929, %v1033
    %v1042 = vadd.f32 %v930, %v1034
    %v1043 = vadd.f32 %v931, %v1035
    %v1044 = vadd.f32 %v932, %v1036
    %v1045 = vmul.f32 %v984, %v282
    %v1046 = vmul.f32 %v988, %v282
    %v1047 = vmul.f32 %v992, %v282
    %v1048 = vmul.f32 %v996, %v282
    %v1049 = vmul.f32 %v1000, %v282
    %v1050 = vmul.f32 %v1004, %v282
    %v1051 = vmul.f32 %v1008, %v282
    %v1052 = vmul.f32 %v1012, %v282
    %v1053 = vadd.f32 %v1037, %v1045
    %v1054 = vadd.f32 %v1038, %v1046
    %v1055 = vadd.f32 %v1039, %v1047
    %v1056 = vadd.f32 %v1040, %v1048
    %v1057 = vadd.f32 %v1041, %v1049
    %v1058 = vadd.f32 %v1042, %v1050
    %v1059 = vadd.f32 %v1043, %v1051
    %v1060 = vadd.f32 %v1044, %v1052
    %v1061 = vlaneseq
    %v1062 = vshrl.u32 %v1061, 7
    %v1063 = vsub.s32 6, %v1062
    %v1064 = vrot.slane %v118, %v1063
    %v1065 = vlaneseq
    %v1066 = vshrl.u32 %v1065, 7
    %v1067 = vsub.s32 6, %v1066
    %v1068 = vrot.slane %v123, %v1067
    %v1069 = vlaneseq
    %v1070 = vshrl.u32 %v1069, 7
    %v1071 = vsub.s32 6, %v1070
    %v1072 = vrot.slane %v128, %v1071
    %v1073 = vlaneseq
    %v1074 = vshrl.u32 %v1073, 7
    %v1075 = vsub.s32 6, %v1074
    %v1076 = vrot.slane %v133, %v1075
    %v1077 = vlaneseq
    %v1078 = vshrl.u32 %v1077, 7
    %v1079 = vsub.s32 6, %v1078
    %v1080 = vrot.slane %v138, %v1079
    %v1081 = vlaneseq
    %v1082 = vshrl.u32 %v1081, 7
    %v1083 = vsub.s32 6, %v1082
    %v1084 = vrot.slane %v143, %v1083
    %v1085 = vlaneseq
    %v1086 = vshrl.u32 %v1085, 7
    %v1087 = vsub.s32 6, %v1086
    %v1088 = vrot.slane %v148, %v1087
    %v1089 = vlaneseq
    %v1090 = vshrl.u32 %v1089, 7
    %v1091 = vsub.s32 6, %v1090
    %v1092 = vrot.slane %v153, %v1091
    %v1093 = vmul.f32 %v1064, %v283
    %v1094 = vmul.f32 %v1068, %v283
    %v1095 = vmul.f32 %v1072, %v283
    %v1096 = vmul.f32 %v1076, %v283
    %v1097 = vmul.f32 %v1080, %v283
    %v1098 = vmul.f32 %v1084, %v283
    %v1099 = vmul.f32 %v1088, %v283
    %v1100 = vmul.f32 %v1092, %v283
    %v1101 = vadd.f32 %v1021, %v1093
    %v1102 = vadd.f32 %v1022, %v1094
    %v1103 = vadd.f32 %v1023, %v1095
    %v1104 = vadd.f32 %v1024, %v1096
    %v1105 = vadd.f32 %v1025, %v1097
    %v1106 = vadd.f32 %v1026, %v1098
    %v1107 = vadd.f32 %v1027, %v1099
    %v1108 = vadd.f32 %v1028, %v1100
    %v1109 = vlaneseq
    %v1110 = vshrl.u32 %v1109, 7
    %v1111 = vsub.s32 6, %v1110
    %v1112 = vrot.slane %v239, %v1111
    %v1113 = vlaneseq
    %v1114 = vshrl.u32 %v1113, 7
    %v1115 = vsub.s32 6, %v1114
    %v1116 = vrot.slane %v244, %v1115
    %v1117 = vlaneseq
    %v1118 = vshrl.u32 %v1117, 7
    %v1119 = vsub.s32 6, %v1118
    %v1120 = vrot.slane %v249, %v1119
    %v1121 = vlaneseq
    %v1122 = vshrl.u32 %v1121, 7
    %v1123 = vsub.s32 6, %v1122
    %v1124 = vrot.slane %v254, %v1123
    %v1125 = vlaneseq
    %v1126 = vshrl.u32 %v1125, 7
    %v1127 = vsub.s32 6, %v1126
    %v1128 = vrot.slane %v259, %v1127
    %v1129 = vlaneseq
    %v1130 = vshrl.u32 %v1129, 7
    %v1131 = vsub.s32 6, %v1130
    %v1132 = vrot.slane %v264, %v1131
    %v1133 = vlaneseq
    %v1134 = vshrl.u32 %v1133, 7
    %v1135 = vsub.s32 6, %v1134
    %v1136 = vrot.slane %v269, %v1135
    %v1137 = vlaneseq
    %v1138 = vshrl.u32 %v1137, 7
    %v1139 = vsub.s32 6, %v1138
    %v1140 = vrot.slane %v274, %v1139
    %v1141 = vmul.f32 %v1112, %v291
    %v1142 = vmul.f32 %v1116, %v291
    %v1143 = vmul.f32 %v1120, %v291
    %v1144 = vmul.f32 %v1124, %v291
    %v1145 = vmul.f32 %v1128, %v291
    %v1146 = vmul.f32 %v1132, %v291
    %v1147 = vmul.f32 %v1136, %v291
    %v1148 = vmul.f32 %v1140, %v291
    %v1149 = vsub.f32 %v1101, %v1141
    %v1150 = vsub.f32 %v1102, %v1142
    %v1151 = vsub.f32 %v1103, %v1143
    %v1152 = vsub.f32 %v1104, %v1144
    %v1153 = vsub.f32 %v1105, %v1145
    %v1154 = vsub.f32 %v1106, %v1146
    %v1155 = vsub.f32 %v1107, %v1147
    %v1156 = vsub.f32 %v1108, %v1148
    %v1157 = vmul.f32 %v1064, %v291
    %v1158 = vmul.f32 %v1068, %v291
    %v1159 = vmul.f32 %v1072, %v291
    %v1160 = vmul.f32 %v1076, %v291
    %v1161 = vmul.f32 %v1080, %v291
    %v1162 = vmul.f32 %v1084, %v291
    %v1163 = vmul.f32 %v1088, %v291
    %v1164 = vmul.f32 %v1092, %v291
    %v1165 = vadd.f32 %v1053, %v1157
    %v1166 = vadd.f32 %v1054, %v1158
    %v1167 = vadd.f32 %v1055, %v1159
    %v1168 = vadd.f32 %v1056, %v1160
    %v1169 = vadd.f32 %v1057, %v1161
    %v1170 = vadd.f32 %v1058, %v1162
    %v1171 = vadd.f32 %v1059, %v1163
    %v1172 = vadd.f32 %v1060, %v1164
    %v1173 = vmul.f32 %v1112, %v283
    %v1174 = vmul.f32 %v1116, %v283
    %v1175 = vmul.f32 %v1120, %v283
    %v1176 = vmul.f32 %v1124, %v283
    %v1177 = vmul.f32 %v1128, %v283
    %v1178 = vmul.f32 %v1132, %v283
    %v1179 = vmul.f32 %v1136, %v283
    %v1180 = vmul.f32 %v1140, %v283
    %v1181 = vadd.f32 %v1165, %v1173
    %v1182 = vadd.f32 %v1166, %v1174
    %v1183 = vadd.f32 %v1167, %v1175
    %v1184 = vadd.f32 %v1168, %v1176
    %v1185 = vadd.f32 %v1169, %v1177
    %v1186 = vadd.f32 %v1170, %v1178
    %v1187 = vadd.f32 %v1171, %v1179
    %v1188 = vadd.f32 %v1172, %v1180
    %v1189 = vlaneseq
    %v1190 = vshrl.u32 %v1189, 7
    %v1191 = vsub.s32 7, %v1190
    %v1192 = vrot.slane %v118, %v1191
    %v1193 = vlaneseq
    %v1194 = vshrl.u32 %v1193, 7
    %v1195 = vsub.s32 7, %v1194
    %v1196 = vrot.slane %v123, %v1195
    %v1197 = vlaneseq
    %v1198 = vshrl.u32 %v1197, 7
    %v1199 = vsub.s32 7, %v1198
    %v1200 = vrot.slane %v128, %v1199
    %v1201 = vlaneseq
    %v1202 = vshrl.u32 %v1201, 7
    %v1203 = vsub.s32 7, %v1202
    %v1204 = vrot.slane %v133, %v1203
    %v1205 = vlaneseq
    %v1206 = vshrl.u32 %v1205, 7
    %v1207 = vsub.s32 7, %v1206
    %v1208 = vrot.slane %v138, %v1207
    %v1209 = vlaneseq
    %v1210 = vshrl.u32 %v1209, 7
    %v1211 = vsub.s32 7, %v1210
    %v1212 = vrot.slane %v143, %v1211
    %v1213 = vlaneseq
    %v1214 = vshrl.u32 %v1213, 7
    %v1215 = vsub.s32 7, %v1214
    %v1216 = vrot.slane %v148, %v1215
    %v1217 = vlaneseq
    %v1218 = vshrl.u32 %v1217, 7
    %v1219 = vsub.s32 7, %v1218
    %v1220 = vrot.slane %v153, %v1219
    %v1221 = vmul.f32 %v1192, %v284
    %v1222 = vmul.f32 %v1196, %v284
    %v1223 = vmul.f32 %v1200, %v284
    %v1224 = vmul.f32 %v1204, %v284
    %v1225 = vmul.f32 %v1208, %v284
    %v1226 = vmul.f32 %v1212, %v284
    %v1227 = vmul.f32 %v1216, %v284
    %v1228 = vmul.f32 %v1220, %v284
    %v1229 = vadd.f32 %v1149, %v1221
    %v1230 = vadd.f32 %v1150, %v1222
    %v1231 = vadd.f32 %v1151, %v1223
    %v1232 = vadd.f32 %v1152, %v1224
    %v1233 = vadd.f32 %v1153, %v1225
    %v1234 = vadd.f32 %v1154, %v1226
    %v1235 = vadd.f32 %v1155, %v1227
    %v1236 = vadd.f32 %v1156, %v1228
    %v1237 = vlaneseq
    %v1238 = vshrl.u32 %v1237, 7
    %v1239 = vsub.s32 7, %v1238
    %v1240 = vrot.slane %v239, %v1239
    %v1241 = vlaneseq
    %v1242 = vshrl.u32 %v1241, 7
    %v1243 = vsub.s32 7, %v1242
    %v1244 = vrot.slane %v244, %v1243
    %v1245 = vlaneseq
    %v1246 = vshrl.u32 %v1245, 7
    %v1247 = vsub.s32 7, %v1246
    %v1248 = vrot.slane %v249, %v1247
    %v1249 = vlaneseq
    %v1250 = vshrl.u32 %v1249, 7
    %v1251 = vsub.s32 7, %v1250
    %v1252 = vrot.slane %v254, %v1251
    %v1253 = vlaneseq
    %v1254 = vshrl.u32 %v1253, 7
    %v1255 = vsub.s32 7, %v1254
    %v1256 = vrot.slane %v259, %v1255
    %v1257 = vlaneseq
    %v1258 = vshrl.u32 %v1257, 7
    %v1259 = vsub.s32 7, %v1258
    %v1260 = vrot.slane %v264, %v1259
    %v1261 = vlaneseq
    %v1262 = vshrl.u32 %v1261, 7
    %v1263 = vsub.s32 7, %v1262
    %v1264 = vrot.slane %v269, %v1263
    %v1265 = vlaneseq
    %v1266 = vshrl.u32 %v1265, 7
    %v1267 = vsub.s32 7, %v1266
    %v1268 = vrot.slane %v274, %v1267
    %v1269 = vmul.f32 %v1240, %v292
    %v1270 = vmul.f32 %v1244, %v292
    %v1271 = vmul.f32 %v1248, %v292
    %v1272 = vmul.f32 %v1252, %v292
    %v1273 = vmul.f32 %v1256, %v292
    %v1274 = vmul.f32 %v1260, %v292
    %v1275 = vmul.f32 %v1264, %v292
    %v1276 = vmul.f32 %v1268, %v292
    %v1277 = vsub.f32 %v1229, %v1269
    %v1278 = vsub.f32 %v1230, %v1270
    %v1279 = vsub.f32 %v1231, %v1271
    %v1280 = vsub.f32 %v1232, %v1272
    %v1281 = vsub.f32 %v1233, %v1273
    %v1282 = vsub.f32 %v1234, %v1274
    %v1283 = vsub.f32 %v1235, %v1275
    %v1284 = vsub.f32 %v1236, %v1276
    %v1285 = vmul.f32 %v1192, %v292
    %v1286 = vmul.f32 %v1196, %v292
    %v1287 = vmul.f32 %v1200, %v292
    %v1288 = vmul.f32 %v1204, %v292
    %v1289 = vmul.f32 %v1208, %v292
    %v1290 = vmul.f32 %v1212, %v292
    %v1291 = vmul.f32 %v1216, %v292
    %v1292 = vmul.f32 %v1220, %v292
    %v1293 = vadd.f32 %v1181, %v1285
    %v1294 = vadd.f32 %v1182, %v1286
    %v1295 = vadd.f32 %v1183, %v1287
    %v1296 = vadd.f32 %v1184, %v1288
    %v1297 = vadd.f32 %v1185, %v1289
    %v1298 = vadd.f32 %v1186, %v1290
    %v1299 = vadd.f32 %v1187, %v1291
    %v1300 = vadd.f32 %v1188, %v1292
    %v1301 = vmul.f32 %v1240, %v284
    %v1302 = vmul.f32 %v1244, %v284
    %v1303 = vmul.f32 %v1248, %v284
    %v1304 = vmul.f32 %v1252, %v284
    %v1305 = vmul.f32 %v1256, %v284
    %v1306 = vmul.f32 %v1260, %v284
    %v1307 = vmul.f32 %v1264, %v284
    %v1308 = vmul.f32 %v1268, %v284
    %v1309 = vadd.f32 %v1293, %v1301
    %v1310 = vadd.f32 %v1294, %v1302
    %v1311 = vadd.f32 %v1295, %v1303
    %v1312 = vadd.f32 %v1296, %v1304
    %v1313 = vadd.f32 %v1297, %v1305
    %v1314 = vadd.f32 %v1298, %v1306
    %v1315 = vadd.f32 %v1299, %v1307
    %v1316 = vadd.f32 %v1300, %v1308
    %v1317 = vld [vmem:[%s5] sm:$0xff]
    %v1318 = vld [vmem:[%s6] sm:$0xff]
    %vm1319 = vcmask 64512
    %v1321 = vsel %vm1319, %v1309, 0
    %v1324 = vsel %vm1319, %v1310, 0
    %v1327 = vsel %vm1319, %v1311, 0
    %v1330 = vsel %vm1319, %v1312, 0
    %v1333 = vsel %vm1319, %v1313, 0
    %v1336 = vsel %vm1319, %v1314, 0
    %v1339 = vsel %vm1319, %v1315, 0
    %v1342 = vsel %vm1319, %v1316, 0
    %1344 = vmatprep.subr.mxu0 0.0
    %1345 = vmatpush1.msra.mxu0 %v1318
    %1346 = vmatprep.subr.mxu0 0.0
    %1347 = vmatpush1.msra.mxu0 0.0
    %1348 = vmatprep.subr.mxu0 0.0
    %1349 = vmatpush1.msra.mxu0 0.0
    %1350 = vmatprep.subr.mxu0 0.0
    %1351 = vmatpush1.msra.mxu0 0.0
    %1352 = vmatprep.subr.mxu0 0.0
    %1353 = vmatpush1.msra.mxu0 0.0
    %1354 = vmatprep.subr.mxu0 0.0
    %1355 = vmatpush1.msra.mxu0 0.0
    %1356 = vmatprep.subr.mxu0 0.0
    %1357 = vmatpush1.msra.mxu0 0.0
    %1358 = vmatprep.subr.mxu0 0.0
    %1359 = vmatpush1.msra.mxu0 0.0
    %1360 = vmatprep.subr.mxu0 0.0
    %1361 = vmatpush1.msra.mxu0 0.0
    %1362 = vmatprep.subr.mxu0 0.0
    %1363 = vmatpush1.msra.mxu0 0.0
    %1364 = vmatprep.subr.mxu0 0.0
    %1365 = vmatpush1.msra.mxu0 0.0
    %1366 = vmatprep.subr.mxu0 0.0
    %1367 = vmatpush1.msra.mxu0 0.0
    %1368 = vmatprep.subr.mxu0 0.0
    %1369 = vmatpush1.msra.mxu0 0.0
    %1370 = vmatprep.subr.mxu0 0.0
    %1371 = vmatpush1.msra.mxu0 0.0
    %1372 = vmatprep.subr.mxu0 0.0
    %1373 = vmatpush1.msra.mxu0 0.0
    %1374 = vmatprep.subr.mxu0 0.0
    %1375 = vmatpush1.msra.mxu0 0.0
    %1376 = vmatprep.subr.mxu0 0.0
    %1377 = vmatpush1.msra.mxu0 0.0
    %1378 = vmatprep.subr.mxu0 0.0
    %1379 = vmatpush1.msra.mxu0 0.0
    %1380 = vmatprep.subr.mxu0 0.0
    %1381 = vmatpush1.msra.mxu0 0.0
    %1382 = vmatprep.subr.mxu0 0.0
    %1383 = vmatpush1.msra.mxu0 0.0
    %1384 = vmatprep.subr.mxu0 0.0
    %1385 = vmatpush1.msra.mxu0 0.0
    %1386 = vmatprep.subr.mxu0 0.0
    %1387 = vmatpush1.msra.mxu0 0.0
    %1388 = vmatprep.subr.mxu0 0.0
    %1389 = vmatpush1.msra.mxu0 0.0
    %1390 = vmatprep.subr.mxu0 0.0
    %1391 = vmatpush1.msra.mxu0 0.0
    %1392 = vmatprep.subr.mxu0 0.0
    %1393 = vmatpush1.msra.mxu0 0.0
    %1394 = vmatprep.subr.mxu0 0.0
    %1395 = vmatpush1.msra.mxu0 0.0
    %1396 = vmatprep.subr.mxu0 0.0
    %1397 = vmatpush1.msra.mxu0 0.0
    %1398 = vmatprep.subr.mxu0 0.0
    %1399 = vmatpush1.msra.mxu0 0.0
    %1400 = vmatprep.subr.mxu0 0.0
    %1401 = vmatpush1.msra.mxu0 0.0
    %1402 = vmatprep.subr.mxu0 0.0
    %1403 = vmatpush1.msra.mxu0 0.0
    %1404 = vmatprep.subr.mxu0 0.0
    %1405 = vmatpush1.msra.mxu0 0.0
    %1406 = vmatprep.subr.mxu0 0.0
    %1407 = vmatpush1.msra.mxu0 0.0
    %1408 = vmatprep.mubr.f32.mxu0 0.0
    %1409 = vmatmul.mubr.f32.gmra.mrb[0].mxu0 %v1321
    %v1410 = vpop.f32.mrb[0].mxu0
    %v1411 = vadd.f32 0.0, %v1410
    %v1412 = vpop.f32.mrb[0].mxu0
    %1413 = vmatprep.mubr.f32.mxu0 0.0
    %1414 = vmatmul.mubr.f32.gmra.mrb[0].mxu0 %v1324
    %v1415 = vpop.f32.mrb[0].mxu0
    %v1416 = vadd.f32 0.0, %v1415
    %v1417 = vpop.f32.mrb[0].mxu0
    %1418 = vmatprep.mubr.f32.mxu0 0.0
    %1419 = vmatmul.mubr.f32.gmra.mrb[0].mxu0 %v1327
    %v1420 = vpop.f32.mrb[0].mxu0
    %v1421 = vadd.f32 0.0, %v1420
    %v1422 = vpop.f32.mrb[0].mxu0
    %1423 = vmatprep.mubr.f32.mxu0 0.0
    %1424 = vmatmul.mubr.f32.gmra.mrb[0].mxu0 %v1330
    %v1425 = vpop.f32.mrb[0].mxu0
    %v1426 = vadd.f32 0.0, %v1425
    %v1427 = vpop.f32.mrb[0].mxu0
    %1428 = vmatprep.mubr.f32.mxu0 0.0
    %1429 = vmatmul.mubr.f32.gmra.mrb[0].mxu0 %v1333
    %v1430 = vpop.f32.mrb[0].mxu0
    %v1431 = vadd.f32 0.0, %v1430
    %v1432 = vpop.f32.mrb[0].mxu0
    %1433 = vmatprep.mubr.f32.mxu0 0.0
    %1434 = vmatmul.mubr.f32.gmra.mrb[0].mxu0 %v1336
    %v1435 = vpop.f32.mrb[0].mxu0
    %v1436 = vadd.f32 0.0, %v1435
    %v1437 = vpop.f32.mrb[0].mxu0
    %1438 = vmatprep.mubr.f32.mxu0 0.0
    %1439 = vmatmul.mubr.f32.gmra.mrb[0].mxu0 %v1339
    %v1440 = vpop.f32.mrb[0].mxu0
    %v1441 = vadd.f32 0.0, %v1440
    %v1442 = vpop.f32.mrb[0].mxu0
    %1443 = vmatprep.mubr.f32.mxu0 0.0
    %1444 = vmatmul.mubr.f32.gmra.mrb[0].mxu0 %v1342
    %v1445 = vpop.f32.mrb[0].mxu0
    %v1446 = vadd.f32 0.0, %v1445
    %v1447 = vpop.f32.mrb[0].mxu0
    %1448 = vdwg.mxu0
    %v1450 = vsel %vm1319, %v1277, 0
    %v1453 = vsel %vm1319, %v1278, 0
    %v1456 = vsel %vm1319, %v1279, 0
    %v1459 = vsel %vm1319, %v1280, 0
    %v1462 = vsel %vm1319, %v1281, 0
    %v1465 = vsel %vm1319, %v1282, 0
    %v1468 = vsel %vm1319, %v1283, 0
    %v1471 = vsel %vm1319, %v1284, 0
    %1473 = vmatprep.subr.mxu0 0.0
    %1474 = vmatpush1.msra.mxu0 %v1317
    %1475 = vmatprep.subr.mxu0 0.0
    %1476 = vmatpush1.msra.mxu0 0.0
    %1477 = vmatprep.subr.mxu0 0.0
    %1478 = vmatpush1.msra.mxu0 0.0
    %1479 = vmatprep.subr.mxu0 0.0
    %1480 = vmatpush1.msra.mxu0 0.0
    %1481 = vmatprep.subr.mxu0 0.0
    %1482 = vmatpush1.msra.mxu0 0.0
    %1483 = vmatprep.subr.mxu0 0.0
    %1484 = vmatpush1.msra.mxu0 0.0
    %1485 = vmatprep.subr.mxu0 0.0
    %1486 = vmatpush1.msra.mxu0 0.0
    %1487 = vmatprep.subr.mxu0 0.0
    %1488 = vmatpush1.msra.mxu0 0.0
    %1489 = vmatprep.subr.mxu0 0.0
    %1490 = vmatpush1.msra.mxu0 0.0
    %1491 = vmatprep.subr.mxu0 0.0
    %1492 = vmatpush1.msra.mxu0 0.0
    %1493 = vmatprep.subr.mxu0 0.0
    %1494 = vmatpush1.msra.mxu0 0.0
    %1495 = vmatprep.subr.mxu0 0.0
    %1496 = vmatpush1.msra.mxu0 0.0
    %1497 = vmatprep.subr.mxu0 0.0
    %1498 = vmatpush1.msra.mxu0 0.0
    %1499 = vmatprep.subr.mxu0 0.0
    %1500 = vmatpush1.msra.mxu0 0.0
    %1501 = vmatprep.subr.mxu0 0.0
    %1502 = vmatpush1.msra.mxu0 0.0
    %1503 = vmatprep.subr.mxu0 0.0
    %1504 = vmatpush1.msra.mxu0 0.0
    %1505 = vmatprep.subr.mxu0 0.0
    %1506 = vmatpush1.msra.mxu0 0.0
    %1507 = vmatprep.subr.mxu0 0.0
    %1508 = vmatpush1.msra.mxu0 0.0
    %1509 = vmatprep.subr.mxu0 0.0
    %1510 = vmatpush1.msra.mxu0 0.0
    %1511 = vmatprep.subr.mxu0 0.0
    %1512 = vmatpush1.msra.mxu0 0.0
    %1513 = vmatprep.subr.mxu0 0.0
    %1514 = vmatpush1.msra.mxu0 0.0
    %1515 = vmatprep.subr.mxu0 0.0
    %1516 = vmatpush1.msra.mxu0 0.0
    %1517 = vmatprep.subr.mxu0 0.0
    %1518 = vmatpush1.msra.mxu0 0.0
    %1519 = vmatprep.subr.mxu0 0.0
    %1520 = vmatpush1.msra.mxu0 0.0
    %1521 = vmatprep.subr.mxu0 0.0
    %1522 = vmatpush1.msra.mxu0 0.0
    %1523 = vmatprep.subr.mxu0 0.0
    %1524 = vmatpush1.msra.mxu0 0.0
    %1525 = vmatprep.subr.mxu0 0.0
    %1526 = vmatpush1.msra.mxu0 0.0
    %1527 = vmatprep.subr.mxu0 0.0
    %1528 = vmatpush1.msra.mxu0 0.0
    %1529 = vmatprep.subr.mxu0 0.0
    %1530 = vmatpush1.msra.mxu0 0.0
    %1531 = vmatprep.subr.mxu0 0.0
    %1532 = vmatpush1.msra.mxu0 0.0
    %1533 = vmatprep.subr.mxu0 0.0
    %1534 = vmatpush1.msra.mxu0 0.0
    %1535 = vmatprep.subr.mxu0 0.0
    %1536 = vmatpush1.msra.mxu0 0.0
    %1537 = vmatprep.mubr.f32.mxu0 0.0
    %1538 = vmatmul.mubr.f32.gmra.mrb[0].mxu0 %v1450
    %v1539 = vpop.f32.mrb[0].mxu0
    %v1540 = vadd.f32 %v1411, %v1539
    %v1541 = vpop.f32.mrb[0].mxu0
    %1542 = vmatprep.mubr.f32.mxu0 0.0
    %1543 = vmatmul.mubr.f32.gmra.mrb[0].mxu0 %v1453
    %v1544 = vpop.f32.mrb[0].mxu0
    %v1545 = vadd.f32 %v1416, %v1544
    %v1546 = vpop.f32.mrb[0].mxu0
    %1547 = vmatprep.mubr.f32.mxu0 0.0
    %1548 = vmatmul.mubr.f32.gmra.mrb[0].mxu0 %v1456
    %v1549 = vpop.f32.mrb[0].mxu0
    %v1550 = vadd.f32 %v1421, %v1549
    %v1551 = vpop.f32.mrb[0].mxu0
    %1552 = vmatprep.mubr.f32.mxu0 0.0
    %1553 = vmatmul.mubr.f32.gmra.mrb[0].mxu0 %v1459
    %v1554 = vpop.f32.mrb[0].mxu0
    %v1555 = vadd.f32 %v1426, %v1554
    %v1556 = vpop.f32.mrb[0].mxu0
    %1557 = vmatprep.mubr.f32.mxu0 0.0
    %1558 = vmatmul.mubr.f32.gmra.mrb[0].mxu0 %v1462
    %v1559 = vpop.f32.mrb[0].mxu0
    %v1560 = vadd.f32 %v1431, %v1559
    %v1561 = vpop.f32.mrb[0].mxu0
    %1562 = vmatprep.mubr.f32.mxu0 0.0
    %1563 = vmatmul.mubr.f32.gmra.mrb[0].mxu0 %v1465
    %v1564 = vpop.f32.mrb[0].mxu0
    %v1565 = vadd.f32 %v1436, %v1564
    %v1566 = vpop.f32.mrb[0].mxu0
    %1567 = vmatprep.mubr.f32.mxu0 0.0
    %1568 = vmatmul.mubr.f32.gmra.mrb[0].mxu0 %v1468
    %v1569 = vpop.f32.mrb[0].mxu0
    %v1570 = vadd.f32 %v1441, %v1569
    %v1571 = vpop.f32.mrb[0].mxu0
    %1572 = vmatprep.mubr.f32.mxu0 0.0
    %1573 = vmatmul.mubr.f32.gmra.mrb[0].mxu0 %v1471
    %v1574 = vpop.f32.mrb[0].mxu0
    %v1575 = vadd.f32 %v1446, %v1574
    %v1576 = vpop.f32.mrb[0].mxu0
    %1577 = vdwg.mxu0
    %1578 = vst [vmem:[#allocation2] sm:$0xff] %v1540
    %1579 = vst [vmem:[#allocation2 + $0x8] sm:$0xff] %v1545
    %1580 = vst [vmem:[#allocation2 + $0x10] sm:$0xff] %v1550
    %1581 = vst [vmem:[#allocation2 + $0x18] sm:$0xff] %v1555
    %1582 = vst [vmem:[#allocation2 + $0x20] sm:$0xff] %v1560
    %1583 = vst [vmem:[#allocation2 + $0x28] sm:$0xff] %v1565
    %1584 = vst [vmem:[#allocation2 + $0x30] sm:$0xff] %v1570
    %1585 = vst [vmem:[#allocation2 + $0x38] sm:$0xff] %v1575
    // Predicated region
    $region30: #{tpu_custom_call.1} parent=1 // pred_check
      _
    $region31: #{tpu_custom_call.1} parent=1 // pred_check_branch
      %1587 = sbr.rel (0) target = $region33
    $region32: #{tpu_custom_call.1} parent=1 // pred_region
      %s1589 = ssub.s32 1024, 1024
      %1590 = vsyncadd [#allocation3], %s1589
      %s1591 = sshll.u32 [#allocation2], 4
      %s1592 = int_to_ptr.vmem [resolvable:$true] %s1591
      %1597 = dma.vmem_to_hbm [thread:$0]  %s1592, 1024, %s7, [#allocation3], 128, 128, 8
    $region33: #{tpu_custom_call.1} parent=1 // pred_fallthru
      _
    // Predicated region
    $region34: #{tpu_custom_call.1} parent=1 // pred_check
      _
    $region35: #{tpu_custom_call.1} parent=1 // pred_check_branch
      %1599 = sbr.rel (0) target = $region37
    $region36: #{tpu_custom_call.1} parent=1 // pred_region
      %1600 = dma.done [#allocation3], 1024
    $region37: #{tpu_custom_call.1} parent=1 // pred_fallthru
      _
    %1601 = vsyncpa [#allocation3], 1

</llo_original>
